<compile_context>
chip_gen: v6e
topology: v6e:2x2x1
jax: 0.10.0
libtpu: 0.0.40
codegen_flags: <defaults>
</compile_context>

<pallas_src>
import jax
import jax.numpy as jnp
from jax.experimental import pallas as pl
from jax.experimental.pallas import tpu as pltpu

EPS = 1e-6     # matches vn_layers EPS
HID = 128      # hidden_dim of VNN_ResnetPointnet (fixed by the module)


# ----------------------------------------------------------------------------
# Glue: graph feature construction (knn + gather + cross), plain JAX.
# ----------------------------------------------------------------------------
def build_graph_feature_cross(pts, k):
    # pts: (B, N, 3) -> feat: (3vec, B, N, k, 3ch), ch = [nbr - x, x, nbr x x]
    inner = jnp.einsum('bnd,bmd->bnm', pts, pts)
    sq = jnp.sum(pts * pts, axis=-1)
    neg_dist = 2.0 * inner - sq[:, :, None] - sq[:, None, :]
    idx = jax.lax.top_k(neg_dist, k)[1]                         # (B, N, k)
    nbrs = jax.vmap(lambda pb, ib: pb[ib])(pts, idx)            # (B, N, k, 3)
    center = jnp.broadcast_to(pts[:, :, None, :], nbrs.shape)   # (B, N, k, 3)
    cross = jnp.cross(nbrs, center)                             # torch.cross(feature, x)
    feat = jnp.stack([nbrs - center, center, cross], axis=3)    # (B, N, k, 3ch, 3vec)
    feat = jnp.transpose(feat, (4, 0, 1, 2, 3))                 # (3vec, B, N, k, 3ch)
    return feat.astype(jnp.float32)


# ----------------------------------------------------------------------------
# Kernel A: conv_pos (3->128, slope 0.2) + mean over k + fc_pos (128->256)
#   feat_ref : (1, 3vec, 3ch, k*tn) bf16   (lane index = ki*tn + pt : lane-dense)
#   wfdT_ref : (2H, 3) bf16   rows 0..H-1 = map_to_feat, rows H..2H-1 = map_to_dir
#   wp_ref   : (H, 2H) bf16   fc_pos
#   out_ref  : (3, tn, 2H) bf16
# ----------------------------------------------------------------------------
def conv_pos_kernel(feat_ref, wfdT_ref, wp_ref, out_ref):
    f32 = jnp.float32
    tn = out_ref.shape[1]
    ktn = feat_ref.shape[3]
    kk = ktn // tn
    hh = wp_ref.shape[0]                                        # H = 128

    wfdT = wfdT_ref[...]                                        # (2H, 3)
    # per-vector-component 3ch -> 2H projection, points on lanes
    pd = [jnp.dot(wfdT, feat_ref[0, v], preferred_element_type=f32)
          for v in range(3)]                                    # (2H, k*tn) f32
    p = [pd[v][:hh] for v in range(3)]
    d = [pd[v][hh:] for v in range(3)]
    dt = p[0] * d[0] + p[1] * d[1] + p[2] * d[2]
    dn = d[0] * d[0] + d[1] * d[1] + d[2] * d[2]
    cf = jnp.where(dt < 0.0, dt * pl.reciprocal(dn + EPS, approx=True), 0.0)

    inv_k = 1.0 / kk
    pooled = []
    for v in range(3):
        act = p[v] - 0.8 * cf * d[v]                            # negative_slope = 0.2
        s = act[:, 0:tn]
        for ki in range(1, kk):                                 # mean over k neighbors:
            s = s + act[:, ki * tn:(ki + 1) * tn]               # tn-wide lane-group adds
        pooled.append(s * inv_k)                                # (H, tn)
    pooled_all = jnp.concatenate(pooled, axis=1)                # (H, 3*tn)

    # fc_pos: contract the H (sublane) axis against wp -> (3*tn, 2H), lane-dense out
    y = jax.lax.dot_general(pooled_all.astype(jnp.bfloat16), wp_ref[...],
                            (((0,), (0,)), ((), ())),
                            preferred_element_type=f32)         # (3*tn, 2H)
    for v in range(3):
        out_ref[v] = y[v * tn:(v + 1) * tn].astype(out_ref.dtype)


# ----------------------------------------------------------------------------
# Kernel B: 5 x VNResnetBlockFC (+ pool-cat folded into split weights) + final
#           N-pool + actvn_c + fc_c + VNStdFeature(normalize_frame=True).
#           One grid step per batch element; activations stay in VMEM.
# ----------------------------------------------------------------------------
def trunk_kernel(x_ref, wd0_ref, w0_ref, wd1_ref, w1_ref, ws_ref,
                 wdc_ref, wc_ref, wstd1_ref, wstd2_ref, wl_ref,
                 zs_ref, r_ref):
    f32 = jnp.float32
    bf = jnp.bfloat16
    n = x_ref.shape[1]
    inv_n = 1.0 / n

    def mm(x, w):
        return jnp.dot(x.astype(bf), w, preferred_element_type=f32)

    def coef_of(dt, dn):
        return jnp.where(dt < 0.0, dt * pl.reciprocal(dn + EPS, approx=True), 0.0)

    def act_pair(p, d):
        # slope-0 VN-LeakyReLU on per-vector-component lists (3 arrays each)
        dt = p[0] * d[0] + p[1] * d[1] + p[2] * d[2]
        dn = d[0] * d[0] + d[1] * d[1] + d[2] * d[2]
        cf = coef_of(dt, dn)
        return [p[v] - cf * d[v] for v in range(3)]

    # ---------------- block_0 (256-wide fc_pos output, no pool-cat) ---------------
    x = [x_ref[v] for v in range(3)]                            # (n, 256) bf16
    wd0 = wd0_ref[0]
    w0 = w0_ref[0]
    wd1 = wd1_ref[0]
    w1 = w1_ref[0]
    ws = ws_ref[0]
    a0 = act_pair(x, [mm(x[v], wd0) for v in range(3)])         # actvn_0 (slope 0)
    h = [mm(a0[v], w0) for v in range(3)]                       # fc_0
    a1 = act_pair(h, [mm(h[v], wd1) for v in range(3)])         # actvn_1 (slope 0)
    x = [(mm(a1[v], w1) + mm(x[v], ws)).astype(bf)              # fc_1 + shortcut
         for v in range(3)]                                     # (n, 128) bf16

    # ---------------- blocks 1..4: pool-cat folded into split weight halves -------
    for i in range(1, 5):
        wd0 = wd0_ref[i]
        w0 = w0_ref[i]
        wd1 = wd1_ref[i]
        w1 = w1_ref[i]
        ws = ws_ref[i]
        pooled = jnp.concatenate(
            [jnp.sum(x[v].astype(f32), axis=0, keepdims=True) * inv_n
             for v in range(3)], axis=0)                        # (3, 128) mean over N
        dp = mm(pooled, wd0[128:])                              # pooled half of map_to_dir
        sp = mm(pooled, ws[128:])                               # pooled half of shortcut
        d0 = [mm(x[v], wd0[:128]) + dp[v:v + 1] for v in range(3)]      # (n, 256)
        dn0 = d0[0] * d0[0] + d0[1] * d0[1] + d0[2] * d0[2]
        dt_x = x[0] * d0[0][:, :128] + x[1] * d0[1][:, :128] + x[2] * d0[2][:, :128]
        dt_p = (pooled[0:1] * d0[0][:, 128:] + pooled[1:2] * d0[1][:, 128:]
                + pooled[2:3] * d0[2][:, 128:])
        cf_x = coef_of(dt_x, dn0[:, :128])
        cf_p = coef_of(dt_p, dn0[:, 128:])
        # fc_0 on the (implicitly concatenated) activated input
        h = [mm(x[v] - cf_x * d0[v][:, :128], w0[:128])
             + mm(pooled[v:v + 1] - cf_p * d0[v][:, 128:], w0[128:])
             for v in range(3)]                                 # (n, 128)
        a1 = act_pair(h, [mm(h[v], wd1) for v in range(3)])
        x = [(mm(a1[v], w1) + mm(x[v], ws[:128]) + sp[v:v + 1]).astype(bf)
             for v in range(3)]                                 # (n, 128) bf16

    # ---------------- final mean pool over N + actvn_c + fc_c ---------------------
    xh = jnp.concatenate(
        [jnp.sum(x[v].astype(f32), axis=0, keepdims=True) * inv_n for v in range(3)],
        axis=0)                                                 # (3, 128), rows = comps

    def vn_rows(p, d, slope):
        dt = jnp.sum(p * d, axis=0, keepdims=True)
        dn = jnp.sum(d * d, axis=0, keepdims=True)
        return p - (1.0 - slope) * coef_of(dt, dn) * d

    ah = vn_rows(xh, mm(xh, wdc_ref[...]), 0.2)                 # actvn_c
    c = mm(ah, wc_ref[...])                                     # fc_c -> (3, c_dim)

    # ---------------- VNStdFeature (normalize_frame=True) -------------------------
    h1 = wstd1_ref.shape[1] // 2
    pd1 = mm(c, wstd1_ref[...])                                 # [feat | dir]
    z1 = vn_rows(pd1[:, :h1], pd1[:, h1:], 0.2)                 # vn1
    h2 = wstd2_ref.shape[1] // 2
    pd2 = mm(z1, wstd2_ref[...])
    z2 = vn_rows(pd2[:, :h2], pd2[:, h2:], 0.2)                 # vn2
    z0 = mm(z2, wl_ref[...])                                    # (3, 128), cols 0/1 valid

    v1 = z0[:, 0:1]
    v2 = z0[:, 1:2]
    n1 = jnp.sqrt(jnp.sum(v1 * v1, axis=0, keepdims=True))
    u1 = v1 / (n1 + EPS)
    v2o = v2 - jnp.sum(v2 * u1, axis=0, keepdims=True) * u1
    n2 = jnp.sqrt(jnp.sum(v2o * v2o, axis=0, keepdims=True))
    u2 = v2o / (n2 + EPS)
    u3 = jnp.concatenate(
        [u1[1:2] * u2[2:3] - u1[2:3] * u2[1:2],
         u1[2:3] * u2[0:1] - u1[0:1] * u2[2:3],
         u1[0:1] * u2[1:2] - u1[1:2] * u2[0:1]], axis=0)        # u1 x u2

    r_ref[0] = jnp.concatenate([u1, u2, u3], axis=1)            # R columns = frame vecs
    zs_ref[0] = jnp.concatenate(
        [jnp.sum(c * u1, axis=0, keepdims=True),
         jnp.sum(c * u2, axis=0, keepdims=True),
         jnp.sum(c * u3, axis=0, keepdims=True)], axis=0)       # (3, c_dim)


# ----------------------------------------------------------------------------
# Wrapper
# ----------------------------------------------------------------------------
def _pick_tile(total, cap):
    if total <= cap:
        return total
    t = (cap // 128) * 128
    while t >= 128:
        if total % t == 0:
            return t
        t -= 128
    t = (cap // 8) * 8
    while t >= 8:
        if total % t == 0:
            return t
        t -= 8
    return total


def _vmem_limit_bytes():
    # ~0.8x physical VMEM (leaves headroom on v7x's 64 MiB, uses v5e/v6e's 128 MiB).
    try:
        info = pltpu.get_tpu_info()
        return min(int(info.vmem_capacity_bytes * 0.8), 112 * 1024 * 1024)
    except Exception:
        return 48 * 1024 * 1024


def rencoder_forward(pcd, params, k, tn_cap=256):
    B, N, _ = pcd.shape
    H = HID
    c_dim = params['wc'].shape[1]
    BN = B * N
    assert N % 8 == 0, "N must be a multiple of 8 (pad the point cloud)"
    assert c_dim % 4 == 0

    bf = jnp.bfloat16
    vmem = _vmem_limit_bytes()

    # ---- graph feature (JAX glue: knn + gather + cross) -------------------------
    feat = build_graph_feature_cross(pcd, k)               # (3vec, B, N, k, 3ch) f32

    # Pack lane-dense, per tile: (n_tiles, 3vec, 3ch, k*tn) with lane = ki*tn + pt
    tn = _pick_tile(BN, tn_cap)
    n_tiles = BN // tn
    f = feat.reshape(3, n_tiles, tn, k, 3)
    f = jnp.transpose(f, (1, 0, 4, 3, 2)).reshape(n_tiles, 3, 3, k * tn).astype(bf)

    wfdT = jnp.concatenate([params['wf'], params['wd']], axis=1).T.astype(bf)  # (2H,3)
    wp = params['wp'].astype(bf)                                               # (H,2H)

    net = pl.pallas_call(
        conv_pos_kernel,
        out_shape=jax.ShapeDtypeStruct((3, BN, 2 * H), bf),
        grid=(n_tiles,),
        in_specs=[
            pl.BlockSpec((1, 3, 3, k * tn), lambda i: (i, 0, 0, 0)),
            pl.BlockSpec(wfdT.shape, lambda i: (0, 0)),
            pl.BlockSpec(wp.shape, lambda i: (0, 0)),
        ],
        out_specs=pl.BlockSpec((3, tn, 2 * H), lambda i: (0, i, 0)),
        compiler_params=pltpu.CompilerParams(
            dimension_semantics=("parallel",), vmem_limit_bytes=vmem),
    )(f, wfdT, wp)

    # ---- trunk weights (bf16); same-shape per-block weights pre-stacked ----------
    blocks = params['blocks']
    wd0_all = jnp.stack([bw['wd0'] for bw in blocks]).astype(bf)   # (5, 256, 256)
    w0_all = jnp.stack([bw['w0'] for bw in blocks]).astype(bf)     # (5, 256, 128)
    wd1_all = jnp.stack([bw['wd1'] for bw in blocks]).astype(bf)   # (5, 128, 128)
    w1_all = jnp.stack([bw['w1'] for bw in blocks]).astype(bf)     # (5, 128, 128)
    ws_all = jnp.stack([bw['ws'] for bw in blocks]).astype(bf)     # (5, 256, 128)
    wstd1 = jnp.concatenate([params['w1f'], params['w1d']], axis=1).astype(bf)
    wstd2 = jnp.concatenate([params['w2f'], params['w2d']], axis=1).astype(bf)
    c4 = c_dim // 4
    wl_pad = jnp.zeros((c4, 128), jnp.float32).at[:, :2].set(params['wl']).astype(bf)
    weights = [wd0_all, w0_all, wd1_all, w1_all, ws_all,
               params['wdc'].astype(bf), params['wc'].astype(bf),
               wstd1, wstd2, wl_pad]

    in_specs = [pl.BlockSpec((3, N, 2 * H), lambda b: (0, b, 0))]
    in_specs += [pl.BlockSpec(w.shape, lambda b, nd=w.ndim: (0,) * nd)
                 for w in weights]

    z_std_k, r_k = pl.pallas_call(
        trunk_kernel,
        out_shape=(jax.ShapeDtypeStruct((B, 3, c_dim), jnp.float32),
                   jax.ShapeDtypeStruct((B, 3, 3), jnp.float32)),
        grid=(B,),
        in_specs=in_specs,
        out_specs=(pl.BlockSpec((1, 3, c_dim), lambda b: (b, 0, 0)),
                   pl.BlockSpec((1, 3, 3), lambda b: (b, 0, 0))),
        compiler_params=pltpu.CompilerParams(
            dimension_semantics=("parallel",), vmem_limit_bytes=vmem),
    )(net, *weights)

    # PyTorch convention: z_std (B, c_dim, 3) flattened to (B, 3*c_dim)
    z_std = jnp.transpose(z_std_k, (0, 2, 1)).reshape(B, c_dim * 3)
    return {'R': r_k, 'z': z_std}


# ----------------------------------------------------------------------------
# Deterministic parameter init (weights stored transposed: (in, out)).
# fc_1 of each block is random (torch zero-inits it) to exercise the full path.
# ----------------------------------------------------------------------------
def init_params(key, c_dim, hidden=HID):
    keys = iter(jax.random.split(key, 40))

    def lin(shape):
        return jax.random.normal(next(keys), shape, jnp.float32) / jnp.sqrt(shape[0])

    params = {
        'wf': lin((3, hidden)),                 # conv_pos.map_to_feat
        'wd': lin((3, hidden)),                 # conv_pos.map_to_dir
        'wp': lin((hidden, 2 * hidden)),        # fc_pos
        'blocks': [],
        'wdc': lin((hidden, hidden)),           # actvn_c.map_to_dir
        'wc': lin((hidden, c_dim)),             # fc_c
        'w1f': lin((c_dim, c_dim // 2)),        # std_feature.vn1.map_to_feat
        'w1d': lin((c_dim, c_dim // 2)),        # std_feature.vn1.map_to_dir
        'w2f': lin((c_dim // 2, c_dim // 4)),   # std_feature.vn2.map_to_feat
        'w2d': lin((c_dim // 2, c_dim // 4)),   # std_feature.vn2.map_to_dir
        'wl': lin((c_dim // 4, 2)),             # std_feature.vn_lin (normalize_frame)
    }
    for _ in range(5):
        params['blocks'].append({
            'wd0': lin((2 * hidden, 2 * hidden)),
            'w0': lin((2 * hidden, hidden)),
            'wd1': lin((hidden, hidden)),
            'w1': lin((hidden, hidden)),
            'ws': lin((2 * hidden, hidden)),
        })
    return params


# ----------------------------------------------------------------------------
# Pure-JAX reference (same math, same bf16-matmul / f32-accumulate / bf16-carry
# policy as the kernels).
# ----------------------------------------------------------------------------
def _bdot(x, w):
    return jnp.einsum('...i,io->...o', x.astype(jnp.bfloat16), w.astype(jnp.bfloat16),
                      preferred_element_type=jnp.float32)


def _vn_act(p, d, slope):
    dot = jnp.sum(p * d, axis=0, keepdims=True)
    dn = jnp.sum(d * d, axis=0, keepdims=True)
    coef = jnp.where(dot < 0.0, dot / (dn + EPS), 0.0)
    return p - (1.0 - slope) * coef * d


def reference_forward(pts, params, k):
    B = pts.shape[0]
    bf = jnp.bfloat16
    f32 = jnp.float32
    feat = build_graph_feature_cross(pts, k)                    # (3,B,N,k,3)
    net = _vn_act(_bdot(feat, params['wf']), _bdot(feat, params['wd']), 0.2)
    net = net.mean(axis=3)                                      # pool over k
    net = _bdot(net, params['wp']).astype(bf)                   # (3,B,N,256) bf16

    def block(x, bw):
        a0 = _vn_act(x, _bdot(x, bw['wd0']), 0.0)
        h = _bdot(a0, bw['w0'])
        a1 = _vn_act(h, _bdot(h, bw['wd1']), 0.0)
        return (_bdot(a1, bw['w1']) + _bdot(x, bw['ws'])).astype(bf)

    net = block(net, params['blocks'][0])
    for i in range(1, 5):
        pooled = jnp.mean(net.astype(f32), axis=2, keepdims=True)
        cat = jnp.concatenate(
            [net.astype(f32), jnp.broadcast_to(pooled, net.shape)], axis=-1)
        net = block(cat, params['blocks'][i])

    net = jnp.mean(net.astype(f32), axis=2)                     # (3,B,128)
    a = _vn_act(net, _bdot(net, params['wdc']), 0.2)
    c = _bdot(a, params['wc'])                                  # (3,B,c_dim)

    z1 = _vn_act(_bdot(c, params['w1f']), _bdot(c, params['w1d']), 0.2)
    z2 = _vn_act(_bdot(z1, params['w2f']), _bdot(z1, params['w2d']), 0.2)
    z0 = _bdot(z2, params['wl'])                                # (3,B,2)
    v1, v2 = z0[..., 0], z0[..., 1]                             # (3,B)
    n1 = jnp.sqrt(jnp.sum(v1 * v1, axis=0, keepdims=True))
    u1 = v1 / (n1 + EPS)
    v2 = v2 - jnp.sum(v2 * u1, axis=0, keepdims=True) * u1
    n2 = jnp.sqrt(jnp.sum(v2 * v2, axis=0, keepdims=True))
    u2 = v2 / (n2 + EPS)
    u3 = jnp.cross(u1, u2, axis=0)                              # (3,B)
    U = jnp.stack([u1, u2, u3], axis=-1)                        # (3,B,3) frame columns
    R = jnp.transpose(U, (1, 0, 2))                             # (B,3,3)
    z_std = jnp.sum(c[:, :, :, None] * U[:, :, None, :], axis=0)  # (B,c_dim,3)
    return z_std.reshape(B, -1), R


if __name__ == "__main__":
    B, N, K_NN = 2, 16, 4
    LATENT = 128

    key = jax.random.PRNGKey(0)
    k_pts, k_par = jax.random.split(key)
    pts = jax.random.normal(k_pts, (B, N, 3), jnp.float32)
    params = init_params(k_par, LATENT)

    out = rencoder_forward(pts, params, K_NN)
    z = jax.block_until_ready(out['z'])
    R = jax.block_until_ready(out['R'])

    z_ref, R_ref = reference_forward(pts, params, K_NN)

    assert z.shape == (B, LATENT * 3)
    assert R.shape == (B, 3, 3)
    assert bool(jnp.all(jnp.isfinite(z))) and bool(jnp.all(jnp.isfinite(R)))

    z_scale = float(jnp.maximum(jnp.max(jnp.abs(z_ref)), 1.0))
    assert float(jnp.max(jnp.abs(z - z_ref))) / z_scale < 5e-2
    assert float(jnp.max(jnp.abs(R - R_ref))) < 5e-2

    print("KERNEL_OK")
</pallas_src>

<mosaic_0001>
module attributes {stable_mosaic.version = 11 : i64} {
  func.func @conv_pos_kernel(%arg0: i32, %arg1: memref<1x3x3x128xbf16, #tpu.memory_space<vmem>>, %arg2: memref<256x3xbf16, #tpu.memory_space<vmem>>, %arg3: memref<128x256xbf16, #tpu.memory_space<vmem>>, %arg4: memref<3x32x256xbf16, #tpu.memory_space<vmem>>) attributes {dimension_semantics = [#tpu.dimension_semantics<parallel>], iteration_bounds = array<i64: 1>, scalar_prefetch = 0 : i64, scratch_operands = 0 : i64, tpu.core_type = #tpu.core_type<tc>, window_params = [{transform_indices = @transform_0, window_bounds = array<i64: 1, 3, 3, 128>}, {pipeline_mode = #tpu.pipeline_mode<synchronous>, transform_indices = @transform_1, window_bounds = array<i64: 256, 3>}, {pipeline_mode = #tpu.pipeline_mode<synchronous>, transform_indices = @transform_2, window_bounds = array<i64: 128, 256>}, {transform_indices = @transform_3, window_bounds = array<i64: 3, 32, 256>}]} {
    %c0 = arith.constant 0 : index
    %c0_0 = arith.constant 0 : index
    %0 = vector.load %arg2[%c0, %c0_0] : memref<256x3xbf16, #tpu.memory_space<vmem>>, vector<256x3xbf16>
    %c0_1 = arith.constant 0 : index
    %c0_2 = arith.constant 0 : index
    %c0_3 = arith.constant 0 : index
    %c0_4 = arith.constant 0 : index
    %1 = vector.load %arg1[%c0_1, %c0_2, %c0_3, %c0_4] : memref<1x3x3x128xbf16, #tpu.memory_space<vmem>>, vector<1x1x3x128xbf16>
    %2 = vector.shape_cast %1 : vector<1x1x3x128xbf16> to vector<3x128xbf16>
    %cst = arith.constant dense<0.000000e+00> : vector<256x128xf32>
    %3 = tpu.matmul %0, %2, %cst {dimension_numbers = #tpu.dot_dimension_numbers<[1], [0], [0], [1], [0, 0, 1, 1], [], []>} : vector<256x3xbf16>, vector<3x128xbf16>, vector<256x128xf32> -> vector<256x128xf32>
    %c0_5 = arith.constant 0 : index
    %c1 = arith.constant 1 : index
    %c0_6 = arith.constant 0 : index
    %c0_7 = arith.constant 0 : index
    %4 = vector.load %arg1[%c0_5, %c1, %c0_6, %c0_7] : memref<1x3x3x128xbf16, #tpu.memory_space<vmem>>, vector<1x1x3x128xbf16>
    %5 = vector.shape_cast %4 : vector<1x1x3x128xbf16> to vector<3x128xbf16>
    %cst_8 = arith.constant dense<0.000000e+00> : vector<256x128xf32>
    %6 = tpu.matmul %0, %5, %cst_8 {dimension_numbers = #tpu.dot_dimension_numbers<[1], [0], [0], [1], [0, 0, 1, 1], [], []>} : vector<256x3xbf16>, vector<3x128xbf16>, vector<256x128xf32> -> vector<256x128xf32>
    %c0_9 = arith.constant 0 : index
    %c2 = arith.constant 2 : index
    %c0_10 = arith.constant 0 : index
    %c0_11 = arith.constant 0 : index
    %7 = vector.load %arg1[%c0_9, %c2, %c0_10, %c0_11] : memref<1x3x3x128xbf16, #tpu.memory_space<vmem>>, vector<1x1x3x128xbf16>
    %8 = vector.shape_cast %7 : vector<1x1x3x128xbf16> to vector<3x128xbf16>
    %cst_12 = arith.constant dense<0.000000e+00> : vector<256x128xf32>
    %9 = tpu.matmul %0, %8, %cst_12 {dimension_numbers = #tpu.dot_dimension_numbers<[1], [0], [0], [1], [0, 0, 1, 1], [], []>} : vector<256x3xbf16>, vector<3x128xbf16>, vector<256x128xf32> -> vector<256x128xf32>
    %10 = vector.extract_strided_slice %3 {offsets = [0, 0], sizes = [128, 128], strides = [1, 1]} : vector<256x128xf32> to vector<128x128xf32>
    %11 = vector.extract_strided_slice %6 {offsets = [0, 0], sizes = [128, 128], strides = [1, 1]} : vector<256x128xf32> to vector<128x128xf32>
    %12 = vector.extract_strided_slice %9 {offsets = [0, 0], sizes = [128, 128], strides = [1, 1]} : vector<256x128xf32> to vector<128x128xf32>
    %13 = vector.extract_strided_slice %3 {offsets = [128, 0], sizes = [128, 128], strides = [1, 1]} : vector<256x128xf32> to vector<128x128xf32>
    %14 = vector.extract_strided_slice %6 {offsets = [128, 0], sizes = [128, 128], strides = [1, 1]} : vector<256x128xf32> to vector<128x128xf32>
    %15 = vector.extract_strided_slice %9 {offsets = [128, 0], sizes = [128, 128], strides = [1, 1]} : vector<256x128xf32> to vector<128x128xf32>
    %16 = arith.mulf %10, %13 : vector<128x128xf32>
    %17 = arith.mulf %11, %14 : vector<128x128xf32>
    %18 = arith.addf %16, %17 : vector<128x128xf32>
    %19 = arith.mulf %12, %15 : vector<128x128xf32>
    %20 = arith.addf %18, %19 : vector<128x128xf32>
    %21 = arith.mulf %13, %13 : vector<128x128xf32>
    %22 = arith.mulf %14, %14 : vector<128x128xf32>
    %23 = arith.addf %21, %22 : vector<128x128xf32>
    %24 = arith.mulf %15, %15 : vector<128x128xf32>
    %25 = arith.addf %23, %24 : vector<128x128xf32>
    %cst_13 = arith.constant 0.000000e+00 : f32
    %26 = vector.broadcast %cst_13 : f32 to vector<128x128xf32>
    %27 = arith.cmpf olt, %20, %26 : vector<128x128xf32>
    %cst_14 = arith.constant 9.99999997E-7 : f32
    %28 = vector.broadcast %cst_14 : f32 to vector<128x128xf32>
    %29 = arith.addf %25, %28 : vector<128x128xf32>
    %30 = tpu.reciprocal %29 {approx = true} : vector<128x128xf32> -> vector<128x128xf32>
    %31 = arith.mulf %20, %30 : vector<128x128xf32>
    %cst_15 = arith.constant 0.000000e+00 : f32
    %32 = vector.broadcast %cst_15 : f32 to vector<128x128xf32>
    %33 = arith.select %27, %31, %32 : vector<128x128xi1>, vector<128x128xf32>
    %cst_16 = arith.constant 8.000000e-01 : f32
    %34 = vector.broadcast %cst_16 : f32 to vector<128x128xf32>
    %35 = arith.mulf %34, %33 : vector<128x128xf32>
    %36 = arith.mulf %35, %13 : vector<128x128xf32>
    %37 = arith.subf %10, %36 : vector<128x128xf32>
    %38 = vector.extract_strided_slice %37 {offsets = [0, 0], sizes = [128, 32], strides = [1, 1]} : vector<128x128xf32> to vector<128x32xf32>
    %39 = vector.extract_strided_slice %37 {offsets = [0, 32], sizes = [128, 32], strides = [1, 1]} : vector<128x128xf32> to vector<128x32xf32>
    %40 = arith.addf %38, %39 : vector<128x32xf32>
    %41 = vector.extract_strided_slice %37 {offsets = [0, 64], sizes = [128, 32], strides = [1, 1]} : vector<128x128xf32> to vector<128x32xf32>
    %42 = arith.addf %40, %41 : vector<128x32xf32>
    %43 = vector.extract_strided_slice %37 {offsets = [0, 96], sizes = [128, 32], strides = [1, 1]} : vector<128x128xf32> to vector<128x32xf32>
    %44 = arith.addf %42, %43 : vector<128x32xf32>
    %cst_17 = arith.constant 2.500000e-01 : f32
    %45 = vector.broadcast %cst_17 : f32 to vector<128x32xf32>
    %46 = arith.mulf %44, %45 : vector<128x32xf32>
    %cst_18 = arith.constant 8.000000e-01 : f32
    %47 = vector.broadcast %cst_18 : f32 to vector<128x128xf32>
    %48 = arith.mulf %47, %33 : vector<128x128xf32>
    %49 = arith.mulf %48, %14 : vector<128x128xf32>
    %50 = arith.subf %11, %49 : vector<128x128xf32>
    %51 = vector.extract_strided_slice %50 {offsets = [0, 0], sizes = [128, 32], strides = [1, 1]} : vector<128x128xf32> to vector<128x32xf32>
    %52 = vector.extract_strided_slice %50 {offsets = [0, 32], sizes = [128, 32], strides = [1, 1]} : vector<128x128xf32> to vector<128x32xf32>
    %53 = arith.addf %51, %52 : vector<128x32xf32>
    %54 = vector.extract_strided_slice %50 {offsets = [0, 64], sizes = [128, 32], strides = [1, 1]} : vector<128x128xf32> to vector<128x32xf32>
    %55 = arith.addf %53, %54 : vector<128x32xf32>
    %56 = vector.extract_strided_slice %50 {offsets = [0, 96], sizes = [128, 32], strides = [1, 1]} : vector<128x128xf32> to vector<128x32xf32>
    %57 = arith.addf %55, %56 : vector<128x32xf32>
    %cst_19 = arith.constant 2.500000e-01 : f32
    %58 = vector.broadcast %cst_19 : f32 to vector<128x32xf32>
    %59 = arith.mulf %57, %58 : vector<128x32xf32>
    %cst_20 = arith.constant 8.000000e-01 : f32
    %60 = vector.broadcast %cst_20 : f32 to vector<128x128xf32>
    %61 = arith.mulf %60, %33 : vector<128x128xf32>
    %62 = arith.mulf %61, %15 : vector<128x128xf32>
    %63 = arith.subf %12, %62 : vector<128x128xf32>
    %64 = vector.extract_strided_slice %63 {offsets = [0, 0], sizes = [128, 32], strides = [1, 1]} : vector<128x128xf32> to vector<128x32xf32>
    %65 = vector.extract_strided_slice %63 {offsets = [0, 32], sizes = [128, 32], strides = [1, 1]} : vector<128x128xf32> to vector<128x32xf32>
    %66 = arith.addf %64, %65 : vector<128x32xf32>
    %67 = vector.extract_strided_slice %63 {offsets = [0, 64], sizes = [128, 32], strides = [1, 1]} : vector<128x128xf32> to vector<128x32xf32>
    %68 = arith.addf %66, %67 : vector<128x32xf32>
    %69 = vector.extract_strided_slice %63 {offsets = [0, 96], sizes = [128, 32], strides = [1, 1]} : vector<128x128xf32> to vector<128x32xf32>
    %70 = arith.addf %68, %69 : vector<128x32xf32>
    %cst_21 = arith.constant 2.500000e-01 : f32
    %71 = vector.broadcast %cst_21 : f32 to vector<128x32xf32>
    %72 = arith.mulf %70, %71 : vector<128x32xf32>
    %73 = tpu.concatenate %46, %59, %72 in 1 : vector<128x32xf32>, vector<128x32xf32>, vector<128x32xf32> -> vector<128x96xf32>
    %74 = arith.truncf %73 : vector<128x96xf32> to vector<128x96xbf16>
    %c0_22 = arith.constant 0 : index
    %c0_23 = arith.constant 0 : index
    %75 = vector.load %arg3[%c0_22, %c0_23] : memref<128x256xbf16, #tpu.memory_space<vmem>>, vector<128x256xbf16>
    %cst_24 = arith.constant dense<0.000000e+00> : vector<96x256xf32>
    %76 = tpu.matmul %74, %75, %cst_24 {dimension_numbers = #tpu.dot_dimension_numbers<[0], [0], [1], [1], [0, 1, 1, 1], [], []>} : vector<128x96xbf16>, vector<128x256xbf16>, vector<96x256xf32> -> vector<96x256xf32>
    %77 = vector.extract_strided_slice %76 {offsets = [0, 0], sizes = [32, 256], strides = [1, 1]} : vector<96x256xf32> to vector<32x256xf32>
    %78 = arith.truncf %77 : vector<32x256xf32> to vector<32x256xbf16>
    %c0_25 = arith.constant 0 : index
    %c0_26 = arith.constant 0 : index
    %c0_27 = arith.constant 0 : index
    %79 = vector.load %arg4[%c0_25, %c0_26, %c0_27] : memref<3x32x256xbf16, #tpu.memory_space<vmem>>, vector<1x32x256xbf16>
    %80 = vector.shape_cast %79 : vector<1x32x256xbf16> to vector<32x256xbf16>
    %81 = vector.shape_cast %78 : vector<32x256xbf16> to vector<1x32x256xbf16>
    tpu.vector_store %arg4[%c0_25, %c0_26, %c0_27], %81 {strides = array<i32>} : memref<3x32x256xbf16, #tpu.memory_space<vmem>>, vector<1x32x256xbf16>,
    %82 = vector.extract_strided_slice %76 {offsets = [32, 0], sizes = [32, 256], strides = [1, 1]} : vector<96x256xf32> to vector<32x256xf32>
    %83 = arith.truncf %82 : vector<32x256xf32> to vector<32x256xbf16>
    %c1_28 = arith.constant 1 : index
    %c0_29 = arith.constant 0 : index
    %c0_30 = arith.constant 0 : index
    %84 = vector.load %arg4[%c1_28, %c0_29, %c0_30] : memref<3x32x256xbf16, #tpu.memory_space<vmem>>, vector<1x32x256xbf16>
    %85 = vector.shape_cast %84 : vector<1x32x256xbf16> to vector<32x256xbf16>
    %86 = vector.shape_cast %83 : vector<32x256xbf16> to vector<1x32x256xbf16>
    tpu.vector_store %arg4[%c1_28, %c0_29, %c0_30], %86 {strides = array<i32>} : memref<3x32x256xbf16, #tpu.memory_space<vmem>>, vector<1x32x256xbf16>,
    %87 = vector.extract_strided_slice %76 {offsets = [64, 0], sizes = [32, 256], strides = [1, 1]} : vector<96x256xf32> to vector<32x256xf32>
    %88 = arith.truncf %87 : vector<32x256xf32> to vector<32x256xbf16>
    %c2_31 = arith.constant 2 : index
    %c0_32 = arith.constant 0 : index
    %c0_33 = arith.constant 0 : index
    %89 = vector.load %arg4[%c2_31, %c0_32, %c0_33] : memref<3x32x256xbf16, #tpu.memory_space<vmem>>, vector<1x32x256xbf16>
    %90 = vector.shape_cast %89 : vector<1x32x256xbf16> to vector<32x256xbf16>
    %91 = vector.shape_cast %88 : vector<32x256xbf16> to vector<1x32x256xbf16>
    tpu.vector_store %arg4[%c2_31, %c0_32, %c0_33], %91 {strides = array<i32>} : memref<3x32x256xbf16, #tpu.memory_space<vmem>>, vector<1x32x256xbf16>,
    return
  }
  func.func @transform_0(%arg0: i32) -> (i32, i32, i32, i32) {
    %c0_i32 = arith.constant 0 : i32
    %c0_i32_0 = arith.constant 0 : i32
    %c0_i32_1 = arith.constant 0 : i32
    %c0_i32_2 = arith.constant 0 : i32
    return %arg0, %c0_i32, %c0_i32_0, %c0_i32_1 : i32, i32, i32, i32
  }
  func.func @transform_1(%arg0: i32) -> (i32, i32) {
    %c0_i32 = arith.constant 0 : i32
    %c0_i32_0 = arith.constant 0 : i32
    %c0_i32_1 = arith.constant 0 : i32
    return %c0_i32, %c0_i32_0 : i32, i32
  }
  func.func @transform_2(%arg0: i32) -> (i32, i32) {
    %c0_i32 = arith.constant 0 : i32
    %c0_i32_0 = arith.constant 0 : i32
    %c0_i32_1 = arith.constant 0 : i32
    return %c0_i32, %c0_i32_0 : i32, i32
  }
  func.func @transform_3(%arg0: i32) -> (i32, i32, i32) {
    %c0_i32 = arith.constant 0 : i32
    %c0_i32_0 = arith.constant 0 : i32
    %c0_i32_1 = arith.constant 0 : i32
    return %c0_i32, %arg0, %c0_i32_0 : i32, i32, i32
  }
}

</mosaic_0001>

<llo_original>
// kernel: tpu_custom_call.1
$region0: #{tpu_custom_call.1}
  #allocation0 [shape = 'u32[]', space=smem, size = 0x4, offset = 0x4, fixed_abs, tag = 'smem constant byte address 0x4 - core index']
  #allocation1 [shape = 'u32[144,128]{1,0:T(1,128)}', space=vmem, size = 0x12000, scoped, tag = 'internal scratch']
  %s0 = inlined_call_operand.vmem [shape: bf16[1,3,3,128], index: 0, kind: input, shape index: {}]
  %s1 = inlined_call_operand.vmem [shape: bf16[256,3], index: 1, kind: input, shape index: {}]
  %s2 = inlined_call_operand.vmem [shape: bf16[128,256], index: 2, kind: input, shape index: {}]
  %s3 = inlined_call_operand.hbm [shape: bf16[3,32,256], index: 3, kind: output, shape index: {}]
  %s4 = sld [smem:[#allocation0]]
  $region22: #{tpu_custom_call.1} parent=0
    _
  %s6 = ssub.s32 1, %s4
  %s7 = scalar_select 0, %s6, %s4
  $region1: #{tpu_custom_call.1} parent=0
    #allocation2 [shape = 'u8[49152]{0}', space=vmem, size = 0xc000, scoped, tag = 'output window, operand 0, single buffered']
    #allocation3 [shape = 's32[1]{0}', space=sflag, size = 0x4, scoped, tag = 'scoped memory for tpu_custom_call.1']
    %8 = vsyncpa [#allocation3], 0
    // Predicated region
    $region2: #{tpu_custom_call.1} parent=1 // pred_check
      _
    $region3: #{tpu_custom_call.1} parent=1 // pred_check_branch
      %10 = sbr.rel (0) target = $region5
    $region4: #{tpu_custom_call.1} parent=1 // pred_region
      _
    $region5: #{tpu_custom_call.1} parent=1 // pred_fallthru
      _
    // Predicated region
    $region6: #{tpu_custom_call.1} parent=1 // pred_check
      _
    $region7: #{tpu_custom_call.1} parent=1 // pred_check_branch
      %12 = sbr.rel (0) target = $region9
    $region8: #{tpu_custom_call.1} parent=1 // pred_region
      _
    $region9: #{tpu_custom_call.1} parent=1 // pred_fallthru
      _
    // Predicated region
    $region10: #{tpu_custom_call.1} parent=1 // pred_check
      _
    $region11: #{tpu_custom_call.1} parent=1 // pred_check_branch
      %14 = sbr.rel (0) target = $region13
    $region12: #{tpu_custom_call.1} parent=1 // pred_region
      _
    $region13: #{tpu_custom_call.1} parent=1 // pred_fallthru
      _
    %v16 = vld [vmem:[%s1] sm:$0xf]
    %v17 = vld [vmem:[%s1 + $0x4] sm:$0xf]
    %v18 = vld [vmem:[%s1 + $0x8] sm:$0xf]
    %v19 = vld [vmem:[%s1 + $0xc] sm:$0xf]
    %v20 = vld [vmem:[%s1 + $0x10] sm:$0xf]
    %v21 = vld [vmem:[%s1 + $0x14] sm:$0xf]
    %v22 = vld [vmem:[%s1 + $0x18] sm:$0xf]
    %v23 = vld [vmem:[%s1 + $0x1c] sm:$0xf]
    %v24 = vld [vmem:[%s1 + $0x20] sm:$0xf]
    %v25 = vld [vmem:[%s1 + $0x24] sm:$0xf]
    %v26 = vld [vmem:[%s1 + $0x28] sm:$0xf]
    %v27 = vld [vmem:[%s1 + $0x2c] sm:$0xf]
    %v28 = vld [vmem:[%s1 + $0x30] sm:$0xf]
    %v29 = vld [vmem:[%s1 + $0x34] sm:$0xf]
    %v30 = vld [vmem:[%s1 + $0x38] sm:$0xf]
    %v31 = vld [vmem:[%s1 + $0x3c] sm:$0xf]
    %v32 = vld [vmem:[%s1 + $0x40] sm:$0xf]
    %v33 = vld [vmem:[%s1 + $0x44] sm:$0xf]
    %v34 = vld [vmem:[%s1 + $0x48] sm:$0xf]
    %v35 = vld [vmem:[%s1 + $0x4c] sm:$0xf]
    %v36 = vld [vmem:[%s1 + $0x50] sm:$0xf]
    %v37 = vld [vmem:[%s1 + $0x54] sm:$0xf]
    %v38 = vld [vmem:[%s1 + $0x58] sm:$0xf]
    %v39 = vld [vmem:[%s1 + $0x5c] sm:$0xf]
    %v40 = vld [vmem:[%s1 + $0x60] sm:$0xf]
    %v41 = vld [vmem:[%s1 + $0x64] sm:$0xf]
    %v42 = vld [vmem:[%s1 + $0x68] sm:$0xf]
    %v43 = vld [vmem:[%s1 + $0x6c] sm:$0xf]
    %v44 = vld [vmem:[%s1 + $0x70] sm:$0xf]
    %v45 = vld [vmem:[%s1 + $0x74] sm:$0xf]
    %v46 = vld [vmem:[%s1 + $0x78] sm:$0xf]
    %v47 = vld [vmem:[%s1 + $0x7c] sm:$0xf]
    %v48 = vld [vmem:[%s0] sm:$0x3]
    %v81 = vunpack.c.l.b16 %v16
    %v82 = vunpack.c.l.b16 %v17
    %v83 = vunpack.c.l.b16 %v18
    %v84 = vunpack.c.l.b16 %v19
    %v85 = vunpack.c.l.b16 %v20
    %v86 = vunpack.c.l.b16 %v21
    %v87 = vunpack.c.l.b16 %v22
    %v88 = vunpack.c.l.b16 %v23
    %v89 = vunpack.c.l.b16 %v24
    %v90 = vunpack.c.l.b16 %v25
    %v91 = vunpack.c.l.b16 %v26
    %v92 = vunpack.c.l.b16 %v27
    %v93 = vunpack.c.l.b16 %v28
    %v94 = vunpack.c.l.b16 %v29
    %v95 = vunpack.c.l.b16 %v30
    %v96 = vunpack.c.l.b16 %v31
    %v97 = vunpack.c.l.b16 %v32
    %v98 = vunpack.c.l.b16 %v33
    %v99 = vunpack.c.l.b16 %v34
    %v100 = vunpack.c.l.b16 %v35
    %v101 = vunpack.c.l.b16 %v36
    %v102 = vunpack.c.l.b16 %v37
    %v103 = vunpack.c.l.b16 %v38
    %v104 = vunpack.c.l.b16 %v39
    %v105 = vunpack.c.l.b16 %v40
    %v106 = vunpack.c.l.b16 %v41
    %v107 = vunpack.c.l.b16 %v42
    %v108 = vunpack.c.l.b16 %v43
    %v109 = vunpack.c.l.b16 %v44
    %v110 = vunpack.c.l.b16 %v45
    %v111 = vunpack.c.l.b16 %v46
    %v112 = vunpack.c.l.b16 %v47
    %v113 = vpack.c.b16 %v82, %v81
    %v114 = vpack.c.b16 %v84, %v83
    %v115 = vpack.c.b16 %v86, %v85
    %v116 = vpack.c.b16 %v88, %v87
    %v117 = vpack.c.b16 %v90, %v89
    %v118 = vpack.c.b16 %v92, %v91
    %v119 = vpack.c.b16 %v94, %v93
    %v120 = vpack.c.b16 %v96, %v95
    %v121 = vpack.c.b16 %v98, %v97
    %v122 = vpack.c.b16 %v100, %v99
    %v123 = vpack.c.b16 %v102, %v101
    %v124 = vpack.c.b16 %v104, %v103
    %v125 = vpack.c.b16 %v106, %v105
    %v126 = vpack.c.b16 %v108, %v107
    %v127 = vpack.c.b16 %v110, %v109
    %v128 = vpack.c.b16 %v112, %v111
    %vm129 = vcmask 23552
    %v131 = vsel %vm129, %v113, 0
    %v134 = vsel %vm129, %v114, 0
    %v137 = vsel %vm129, %v115, 0
    %v140 = vsel %vm129, %v116, 0
    %v143 = vsel %vm129, %v117, 0
    %v146 = vsel %vm129, %v118, 0
    %v149 = vsel %vm129, %v119, 0
    %v152 = vsel %vm129, %v120, 0
    %v155 = vsel %vm129, %v121, 0
    %v158 = vsel %vm129, %v122, 0
    %v161 = vsel %vm129, %v123, 0
    %v164 = vsel %vm129, %v124, 0
    %v167 = vsel %vm129, %v125, 0
    %v170 = vsel %vm129, %v126, 0
    %v173 = vsel %vm129, %v127, 0
    %v176 = vsel %vm129, %v128, 0
    %vm178 = vcmask 1040384
    %vm179 = vcmask 1041408
    %v180 = vsel %vm178, 4294967295, 65535
    %v181 = vsel %vm179, %v180, 0
    %v183 = vand.u32 %v48, %v181
    %185 = vmatprep.subr.bf16.mxu0 0
    %186 = vmatpush1.bf16.msra.mxu0 0
    %187 = vmatprep.subr.bf16.mxu0 0
    %188 = vmatpush1.bf16.msra.mxu0 0
    %189 = vmatprep.subr.bf16.mxu0 0
    %190 = vmatpush1.bf16.msra.mxu0 0
    %191 = vmatprep.subr.bf16.mxu0 0
    %192 = vmatpush1.bf16.msra.mxu0 0
    %193 = vmatprep.subr.bf16.mxu0 0
    %194 = vmatpush1.bf16.msra.mxu0 0
    %195 = vmatprep.subr.bf16.mxu0 0
    %196 = vmatpush1.bf16.msra.mxu0 0
    %197 = vmatprep.subr.bf16.mxu0 0
    %198 = vmatpush1.bf16.msra.mxu0 0
    %199 = vmatprep.subr.bf16.mxu0 0
    %200 = vmatpush1.bf16.msra.mxu0 %v183
    %201 = vmatprep.subr.bf16.mxu0 0
    %202 = vmatpush2.bf16.msra.mxu0 0
    %203 = vmatprep.subr.bf16.mxu0 0
    %204 = vmatpush2.bf16.msra.mxu0 0
    %205 = vmatprep.subr.bf16.mxu0 0
    %206 = vmatpush2.bf16.msra.mxu0 0
    %207 = vmatprep.subr.bf16.mxu0 0
    %208 = vmatpush2.bf16.msra.mxu0 0
    %209 = vmatprep.subr.bf16.mxu0 0
    %210 = vmatpush2.bf16.msra.mxu0 0
    %211 = vmatprep.subr.bf16.mxu0 0
    %212 = vmatpush2.bf16.msra.mxu0 0
    %213 = vmatprep.subr.bf16.mxu0 0
    %214 = vmatpush2.bf16.msra.mxu0 0
    %215 = vmatprep.subr.bf16.mxu0 0
    %216 = vmatpush2.bf16.msra.mxu0 0
    %217 = vmatprep.mubr.bf16.mxu0 0
    %218 = vmatmul.mubr.bf16.gmra.mxu0 %v131
    %v219 = vpop.f32.mrf.mxu0
    %v220 = vadd.f32 0.0, %v219
    %v221 = vpop.f32.mrf.mxu0
    %v222 = vpop.f32.mrf.mxu0
    %v223 = vadd.f32 0.0, %v222
    %v224 = vpop.f32.mrf.mxu0
    %225 = vmatprep.mubr.bf16.mxu0 0
    %226 = vmatmul.mubr.bf16.gmra.mxu0 %v134
    %v227 = vpop.f32.mrf.mxu0
    %v228 = vadd.f32 0.0, %v227
    %v229 = vpop.f32.mrf.mxu0
    %v230 = vpop.f32.mrf.mxu0
    %v231 = vadd.f32 0.0, %v230
    %v232 = vpop.f32.mrf.mxu0
    %233 = vmatprep.mubr.bf16.mxu0 0
    %234 = vmatmul.mubr.bf16.gmra.mxu0 %v137
    %v235 = vpop.f32.mrf.mxu0
    %v236 = vadd.f32 0.0, %v235
    %v237 = vpop.f32.mrf.mxu0
    %v238 = vpop.f32.mrf.mxu0
    %v239 = vadd.f32 0.0, %v238
    %v240 = vpop.f32.mrf.mxu0
    %241 = vmatprep.mubr.bf16.mxu0 0
    %242 = vmatmul.mubr.bf16.gmra.mxu0 %v140
    %v243 = vpop.f32.mrf.mxu0
    %v244 = vadd.f32 0.0, %v243
    %v245 = vpop.f32.mrf.mxu0
    %v246 = vpop.f32.mrf.mxu0
    %v247 = vadd.f32 0.0, %v246
    %v248 = vpop.f32.mrf.mxu0
    %249 = vmatprep.mubr.bf16.mxu0 0
    %250 = vmatmul.mubr.bf16.gmra.mxu0 %v143
    %v251 = vpop.f32.mrf.mxu0
    %v252 = vadd.f32 0.0, %v251
    %v253 = vpop.f32.mrf.mxu0
    %v254 = vpop.f32.mrf.mxu0
    %v255 = vadd.f32 0.0, %v254
    %v256 = vpop.f32.mrf.mxu0
    %257 = vmatprep.mubr.bf16.mxu0 0
    %258 = vmatmul.mubr.bf16.gmra.mxu0 %v146
    %v259 = vpop.f32.mrf.mxu0
    %v260 = vadd.f32 0.0, %v259
    %v261 = vpop.f32.mrf.mxu0
    %v262 = vpop.f32.mrf.mxu0
    %v263 = vadd.f32 0.0, %v262
    %v264 = vpop.f32.mrf.mxu0
    %265 = vmatprep.mubr.bf16.mxu0 0
    %266 = vmatmul.mubr.bf16.gmra.mxu0 %v149
    %v267 = vpop.f32.mrf.mxu0
    %v268 = vadd.f32 0.0, %v267
    %v269 = vpop.f32.mrf.mxu0
    %v270 = vpop.f32.mrf.mxu0
    %v271 = vadd.f32 0.0, %v270
    %v272 = vpop.f32.mrf.mxu0
    %273 = vmatprep.mubr.bf16.mxu0 0
    %274 = vmatmul.mubr.bf16.gmra.mxu0 %v152
    %v275 = vpop.f32.mrf.mxu0
    %v276 = vadd.f32 0.0, %v275
    %v277 = vpop.f32.mrf.mxu0
    %v278 = vpop.f32.mrf.mxu0
    %v279 = vadd.f32 0.0, %v278
    %v280 = vpop.f32.mrf.mxu0
    %281 = vmatprep.mubr.bf16.mxu0 0
    %282 = vmatmul.mubr.bf16.gmra.mxu0 %v155
    %v283 = vpop.f32.mrf.mxu0
    %v284 = vadd.f32 0.0, %v283
    %v285 = vpop.f32.mrf.mxu0
    %v286 = vpop.f32.mrf.mxu0
    %v287 = vadd.f32 0.0, %v286
    %v288 = vpop.f32.mrf.mxu0
    %289 = vmatprep.mubr.bf16.mxu0 0
    %290 = vmatmul.mubr.bf16.gmra.mxu0 %v158
    %v291 = vpop.f32.mrf.mxu0
    %v292 = vadd.f32 0.0, %v291
    %v293 = vpop.f32.mrf.mxu0
    %v294 = vpop.f32.mrf.mxu0
    %v295 = vadd.f32 0.0, %v294
    %v296 = vpop.f32.mrf.mxu0
    %297 = vmatprep.mubr.bf16.mxu0 0
    %298 = vmatmul.mubr.bf16.gmra.mxu0 %v161
    %v299 = vpop.f32.mrf.mxu0
    %v300 = vadd.f32 0.0, %v299
    %v301 = vpop.f32.mrf.mxu0
    %v302 = vpop.f32.mrf.mxu0
    %v303 = vadd.f32 0.0, %v302
    %v304 = vpop.f32.mrf.mxu0
    %305 = vmatprep.mubr.bf16.mxu0 0
    %306 = vmatmul.mubr.bf16.gmra.mxu0 %v164
    %v307 = vpop.f32.mrf.mxu0
    %v308 = vadd.f32 0.0, %v307
    %v309 = vpop.f32.mrf.mxu0
    %v310 = vpop.f32.mrf.mxu0
    %v311 = vadd.f32 0.0, %v310
    %v312 = vpop.f32.mrf.mxu0
    %313 = vmatprep.mubr.bf16.mxu0 0
    %314 = vmatmul.mubr.bf16.gmra.mxu0 %v167
    %v315 = vpop.f32.mrf.mxu0
    %v316 = vadd.f32 0.0, %v315
    %v317 = vpop.f32.mrf.mxu0
    %v318 = vpop.f32.mrf.mxu0
    %v319 = vadd.f32 0.0, %v318
    %v320 = vpop.f32.mrf.mxu0
    %321 = vmatprep.mubr.bf16.mxu0 0
    %322 = vmatmul.mubr.bf16.gmra.mxu0 %v170
    %v323 = vpop.f32.mrf.mxu0
    %v324 = vadd.f32 0.0, %v323
    %v325 = vpop.f32.mrf.mxu0
    %v326 = vpop.f32.mrf.mxu0
    %v327 = vadd.f32 0.0, %v326
    %v328 = vpop.f32.mrf.mxu0
    %329 = vmatprep.mubr.bf16.mxu0 0
    %330 = vmatmul.mubr.bf16.gmra.mxu0 %v173
    %v331 = vpop.f32.mrf.mxu0
    %v332 = vadd.f32 0.0, %v331
    %v333 = vpop.f32.mrf.mxu0
    %v334 = vpop.f32.mrf.mxu0
    %v335 = vadd.f32 0.0, %v334
    %v336 = vpop.f32.mrf.mxu0
    %337 = vmatprep.mubr.bf16.mxu0 0
    %338 = vmatmul.mubr.bf16.gmra.mxu0 %v176
    %v339 = vpop.f32.mrf.mxu0
    %v340 = vadd.f32 0.0, %v339
    %v341 = vpop.f32.mrf.mxu0
    %v342 = vpop.f32.mrf.mxu0
    %v343 = vadd.f32 0.0, %v342
    %v344 = vpop.f32.mrf.mxu0
    %345 = vdwg.mxu0
    %s346 = scalar_lea.vmem %s0, 2
    %v347 = vld [vmem:[%s346] sm:$0x3]
    %v349 = vand.u32 %v347, %v181
    %351 = vmatprep.subr.bf16.mxu0 0
    %352 = vmatpush1.bf16.msra.mxu0 0
    %353 = vmatprep.subr.bf16.mxu0 0
    %354 = vmatpush1.bf16.msra.mxu0 0
    %355 = vmatprep.subr.bf16.mxu0 0
    %356 = vmatpush1.bf16.msra.mxu0 0
    %357 = vmatprep.subr.bf16.mxu0 0
    %358 = vmatpush1.bf16.msra.mxu0 0
    %359 = vmatprep.subr.bf16.mxu0 0
    %360 = vmatpush1.bf16.msra.mxu0 0
    %361 = vmatprep.subr.bf16.mxu0 0
    %362 = vmatpush1.bf16.msra.mxu0 0
    %363 = vmatprep.subr.bf16.mxu0 0
    %364 = vmatpush1.bf16.msra.mxu0 0
    %365 = vmatprep.subr.bf16.mxu0 0
    %366 = vmatpush1.bf16.msra.mxu0 %v349
    %367 = vmatprep.subr.bf16.mxu0 0
    %368 = vmatpush2.bf16.msra.mxu0 0
    %369 = vmatprep.subr.bf16.mxu0 0
    %370 = vmatpush2.bf16.msra.mxu0 0
    %371 = vmatprep.subr.bf16.mxu0 0
    %372 = vmatpush2.bf16.msra.mxu0 0
    %373 = vmatprep.subr.bf16.mxu0 0
    %374 = vmatpush2.bf16.msra.mxu0 0
    %375 = vmatprep.subr.bf16.mxu0 0
    %376 = vmatpush2.bf16.msra.mxu0 0
    %377 = vmatprep.subr.bf16.mxu0 0
    %378 = vmatpush2.bf16.msra.mxu0 0
    %379 = vmatprep.subr.bf16.mxu0 0
    %380 = vmatpush2.bf16.msra.mxu0 0
    %381 = vmatprep.subr.bf16.mxu0 0
    %382 = vmatpush2.bf16.msra.mxu0 0
    %383 = vmatprep.mubr.bf16.mxu0 0
    %384 = vmatmul.mubr.bf16.gmra.mxu0 %v131
    %v385 = vpop.f32.mrf.mxu0
    %v386 = vadd.f32 0.0, %v385
    %v387 = vpop.f32.mrf.mxu0
    %v388 = vpop.f32.mrf.mxu0
    %v389 = vadd.f32 0.0, %v388
    %v390 = vpop.f32.mrf.mxu0
    %391 = vmatprep.mubr.bf16.mxu0 0
    %392 = vmatmul.mubr.bf16.gmra.mxu0 %v134
    %v393 = vpop.f32.mrf.mxu0
    %v394 = vadd.f32 0.0, %v393
    %v395 = vpop.f32.mrf.mxu0
    %v396 = vpop.f32.mrf.mxu0
    %v397 = vadd.f32 0.0, %v396
    %v398 = vpop.f32.mrf.mxu0
    %399 = vmatprep.mubr.bf16.mxu0 0
    %400 = vmatmul.mubr.bf16.gmra.mxu0 %v137
    %v401 = vpop.f32.mrf.mxu0
    %v402 = vadd.f32 0.0, %v401
    %v403 = vpop.f32.mrf.mxu0
    %v404 = vpop.f32.mrf.mxu0
    %v405 = vadd.f32 0.0, %v404
    %v406 = vpop.f32.mrf.mxu0
    %407 = vmatprep.mubr.bf16.mxu0 0
    %408 = vmatmul.mubr.bf16.gmra.mxu0 %v140
    %v409 = vpop.f32.mrf.mxu0
    %v410 = vadd.f32 0.0, %v409
    %v411 = vpop.f32.mrf.mxu0
    %v412 = vpop.f32.mrf.mxu0
    %v413 = vadd.f32 0.0, %v412
    %v414 = vpop.f32.mrf.mxu0
    %415 = vmatprep.mubr.bf16.mxu0 0
    %416 = vmatmul.mubr.bf16.gmra.mxu0 %v143
    %v417 = vpop.f32.mrf.mxu0
    %v418 = vadd.f32 0.0, %v417
    %v419 = vpop.f32.mrf.mxu0
    %v420 = vpop.f32.mrf.mxu0
    %v421 = vadd.f32 0.0, %v420
    %v422 = vpop.f32.mrf.mxu0
    %423 = vmatprep.mubr.bf16.mxu0 0
    %424 = vmatmul.mubr.bf16.gmra.mxu0 %v146
    %v425 = vpop.f32.mrf.mxu0
    %v426 = vadd.f32 0.0, %v425
    %v427 = vpop.f32.mrf.mxu0
    %v428 = vpop.f32.mrf.mxu0
    %v429 = vadd.f32 0.0, %v428
    %v430 = vpop.f32.mrf.mxu0
    %431 = vmatprep.mubr.bf16.mxu0 0
    %432 = vmatmul.mubr.bf16.gmra.mxu0 %v149
    %v433 = vpop.f32.mrf.mxu0
    %v434 = vadd.f32 0.0, %v433
    %v435 = vpop.f32.mrf.mxu0
    %v436 = vpop.f32.mrf.mxu0
    %v437 = vadd.f32 0.0, %v436
    %v438 = vpop.f32.mrf.mxu0
    %439 = vmatprep.mubr.bf16.mxu0 0
    %440 = vmatmul.mubr.bf16.gmra.mxu0 %v152
    %v441 = vpop.f32.mrf.mxu0
    %v442 = vadd.f32 0.0, %v441
    %v443 = vpop.f32.mrf.mxu0
    %v444 = vpop.f32.mrf.mxu0
    %v445 = vadd.f32 0.0, %v444
    %v446 = vpop.f32.mrf.mxu0
    %447 = vmatprep.mubr.bf16.mxu0 0
    %448 = vmatmul.mubr.bf16.gmra.mxu0 %v155
    %v449 = vpop.f32.mrf.mxu0
    %v450 = vadd.f32 0.0, %v449
    %v451 = vpop.f32.mrf.mxu0
    %v452 = vpop.f32.mrf.mxu0
    %v453 = vadd.f32 0.0, %v452
    %v454 = vpop.f32.mrf.mxu0
    %455 = vmatprep.mubr.bf16.mxu0 0
    %456 = vmatmul.mubr.bf16.gmra.mxu0 %v158
    %v457 = vpop.f32.mrf.mxu0
    %v458 = vadd.f32 0.0, %v457
    %v459 = vpop.f32.mrf.mxu0
    %v460 = vpop.f32.mrf.mxu0
    %v461 = vadd.f32 0.0, %v460
    %v462 = vpop.f32.mrf.mxu0
    %463 = vmatprep.mubr.bf16.mxu0 0
    %464 = vmatmul.mubr.bf16.gmra.mxu0 %v161
    %v465 = vpop.f32.mrf.mxu0
    %v466 = vadd.f32 0.0, %v465
    %v467 = vpop.f32.mrf.mxu0
    %v468 = vpop.f32.mrf.mxu0
    %v469 = vadd.f32 0.0, %v468
    %v470 = vpop.f32.mrf.mxu0
    %471 = vmatprep.mubr.bf16.mxu0 0
    %472 = vmatmul.mubr.bf16.gmra.mxu0 %v164
    %v473 = vpop.f32.mrf.mxu0
    %v474 = vadd.f32 0.0, %v473
    %v475 = vpop.f32.mrf.mxu0
    %v476 = vpop.f32.mrf.mxu0
    %v477 = vadd.f32 0.0, %v476
    %v478 = vpop.f32.mrf.mxu0
    %479 = vmatprep.mubr.bf16.mxu0 0
    %480 = vmatmul.mubr.bf16.gmra.mxu0 %v167
    %v481 = vpop.f32.mrf.mxu0
    %v482 = vadd.f32 0.0, %v481
    %v483 = vpop.f32.mrf.mxu0
    %v484 = vpop.f32.mrf.mxu0
    %v485 = vadd.f32 0.0, %v484
    %v486 = vpop.f32.mrf.mxu0
    %487 = vmatprep.mubr.bf16.mxu0 0
    %488 = vmatmul.mubr.bf16.gmra.mxu0 %v170
    %v489 = vpop.f32.mrf.mxu0
    %v490 = vadd.f32 0.0, %v489
    %v491 = vpop.f32.mrf.mxu0
    %v492 = vpop.f32.mrf.mxu0
    %v493 = vadd.f32 0.0, %v492
    %v494 = vpop.f32.mrf.mxu0
    %495 = vmatprep.mubr.bf16.mxu0 0
    %496 = vmatmul.mubr.bf16.gmra.mxu0 %v173
    %v497 = vpop.f32.mrf.mxu0
    %v498 = vadd.f32 0.0, %v497
    %v499 = vpop.f32.mrf.mxu0
    %v500 = vpop.f32.mrf.mxu0
    %v501 = vadd.f32 0.0, %v500
    %v502 = vpop.f32.mrf.mxu0
    %503 = vmatprep.mubr.bf16.mxu0 0
    %504 = vmatmul.mubr.bf16.gmra.mxu0 %v176
    %v505 = vpop.f32.mrf.mxu0
    %v506 = vadd.f32 0.0, %v505
    %v507 = vpop.f32.mrf.mxu0
    %v508 = vpop.f32.mrf.mxu0
    %v509 = vadd.f32 0.0, %v508
    %v510 = vpop.f32.mrf.mxu0
    %511 = vdwg.mxu0
    %s512 = scalar_lea.vmem %s0, 4
    %v513 = vld [vmem:[%s512] sm:$0x3]
    %v515 = vand.u32 %v513, %v181
    %517 = vmatprep.subr.bf16.mxu0 0
    %518 = vmatpush1.bf16.msra.mxu0 0
    %519 = vmatprep.subr.bf16.mxu0 0
    %520 = vmatpush1.bf16.msra.mxu0 0
    %521 = vmatprep.subr.bf16.mxu0 0
    %522 = vmatpush1.bf16.msra.mxu0 0
    %523 = vmatprep.subr.bf16.mxu0 0
    %524 = vmatpush1.bf16.msra.mxu0 0
    %525 = vmatprep.subr.bf16.mxu0 0
    %526 = vmatpush1.bf16.msra.mxu0 0
    %527 = vmatprep.subr.bf16.mxu0 0
    %528 = vmatpush1.bf16.msra.mxu0 0
    %529 = vmatprep.subr.bf16.mxu0 0
    %530 = vmatpush1.bf16.msra.mxu0 0
    %531 = vmatprep.subr.bf16.mxu0 0
    %532 = vmatpush1.bf16.msra.mxu0 %v515
    %533 = vmatprep.subr.bf16.mxu0 0
    %534 = vmatpush2.bf16.msra.mxu0 0
    %535 = vmatprep.subr.bf16.mxu0 0
    %536 = vmatpush2.bf16.msra.mxu0 0
    %537 = vmatprep.subr.bf16.mxu0 0
    %538 = vmatpush2.bf16.msra.mxu0 0
    %539 = vmatprep.subr.bf16.mxu0 0
    %540 = vmatpush2.bf16.msra.mxu0 0
    %541 = vmatprep.subr.bf16.mxu0 0
    %542 = vmatpush2.bf16.msra.mxu0 0
    %543 = vmatprep.subr.bf16.mxu0 0
    %544 = vmatpush2.bf16.msra.mxu0 0
    %545 = vmatprep.subr.bf16.mxu0 0
    %546 = vmatpush2.bf16.msra.mxu0 0
    %547 = vmatprep.subr.bf16.mxu0 0
    %548 = vmatpush2.bf16.msra.mxu0 0
    %549 = vmatprep.mubr.bf16.mxu0 0
    %550 = vmatmul.mubr.bf16.gmra.mxu0 %v131
    %v551 = vpop.f32.mrf.mxu0
    %v552 = vadd.f32 0.0, %v551
    %v553 = vpop.f32.mrf.mxu0
    %v554 = vpop.f32.mrf.mxu0
    %v555 = vadd.f32 0.0, %v554
    %v556 = vpop.f32.mrf.mxu0
    %557 = vmatprep.mubr.bf16.mxu0 0
    %558 = vmatmul.mubr.bf16.gmra.mxu0 %v134
    %v559 = vpop.f32.mrf.mxu0
    %v560 = vadd.f32 0.0, %v559
    %v561 = vpop.f32.mrf.mxu0
    %v562 = vpop.f32.mrf.mxu0
    %v563 = vadd.f32 0.0, %v562
    %v564 = vpop.f32.mrf.mxu0
    %565 = vmatprep.mubr.bf16.mxu0 0
    %566 = vmatmul.mubr.bf16.gmra.mxu0 %v137
    %v567 = vpop.f32.mrf.mxu0
    %v568 = vadd.f32 0.0, %v567
    %v569 = vpop.f32.mrf.mxu0
    %v570 = vpop.f32.mrf.mxu0
    %v571 = vadd.f32 0.0, %v570
    %v572 = vpop.f32.mrf.mxu0
    %573 = vmatprep.mubr.bf16.mxu0 0
    %574 = vmatmul.mubr.bf16.gmra.mxu0 %v140
    %v575 = vpop.f32.mrf.mxu0
    %v576 = vadd.f32 0.0, %v575
    %v577 = vpop.f32.mrf.mxu0
    %v578 = vpop.f32.mrf.mxu0
    %v579 = vadd.f32 0.0, %v578
    %v580 = vpop.f32.mrf.mxu0
    %581 = vmatprep.mubr.bf16.mxu0 0
    %582 = vmatmul.mubr.bf16.gmra.mxu0 %v143
    %v583 = vpop.f32.mrf.mxu0
    %v584 = vadd.f32 0.0, %v583
    %v585 = vpop.f32.mrf.mxu0
    %v586 = vpop.f32.mrf.mxu0
    %v587 = vadd.f32 0.0, %v586
    %v588 = vpop.f32.mrf.mxu0
    %589 = vmatprep.mubr.bf16.mxu0 0
    %590 = vmatmul.mubr.bf16.gmra.mxu0 %v146
    %v591 = vpop.f32.mrf.mxu0
    %v592 = vadd.f32 0.0, %v591
    %v593 = vpop.f32.mrf.mxu0
    %v594 = vpop.f32.mrf.mxu0
    %v595 = vadd.f32 0.0, %v594
    %v596 = vpop.f32.mrf.mxu0
    %597 = vmatprep.mubr.bf16.mxu0 0
    %598 = vmatmul.mubr.bf16.gmra.mxu0 %v149
    %v599 = vpop.f32.mrf.mxu0
    %v600 = vadd.f32 0.0, %v599
    %v601 = vpop.f32.mrf.mxu0
    %v602 = vpop.f32.mrf.mxu0
    %v603 = vadd.f32 0.0, %v602
    %v604 = vpop.f32.mrf.mxu0
    %605 = vmatprep.mubr.bf16.mxu0 0
    %606 = vmatmul.mubr.bf16.gmra.mxu0 %v152
    %v607 = vpop.f32.mrf.mxu0
    %v608 = vadd.f32 0.0, %v607
    %v609 = vpop.f32.mrf.mxu0
    %v610 = vpop.f32.mrf.mxu0
    %v611 = vadd.f32 0.0, %v610
    %v612 = vpop.f32.mrf.mxu0
    %613 = vmatprep.mubr.bf16.mxu0 0
    %614 = vmatmul.mubr.bf16.gmra.mxu0 %v155
    %v615 = vpop.f32.mrf.mxu0
    %v616 = vadd.f32 0.0, %v615
    %v617 = vpop.f32.mrf.mxu0
    %v618 = vpop.f32.mrf.mxu0
    %v619 = vadd.f32 0.0, %v618
    %v620 = vpop.f32.mrf.mxu0
    %621 = vmatprep.mubr.bf16.mxu0 0
    %622 = vmatmul.mubr.bf16.gmra.mxu0 %v158
    %v623 = vpop.f32.mrf.mxu0
    %v624 = vadd.f32 0.0, %v623
    %v625 = vpop.f32.mrf.mxu0
    %v626 = vpop.f32.mrf.mxu0
    %v627 = vadd.f32 0.0, %v626
    %v628 = vpop.f32.mrf.mxu0
    %629 = vmatprep.mubr.bf16.mxu0 0
    %630 = vmatmul.mubr.bf16.gmra.mxu0 %v161
    %v631 = vpop.f32.mrf.mxu0
    %v632 = vadd.f32 0.0, %v631
    %v633 = vpop.f32.mrf.mxu0
    %v634 = vpop.f32.mrf.mxu0
    %v635 = vadd.f32 0.0, %v634
    %v636 = vpop.f32.mrf.mxu0
    %637 = vmatprep.mubr.bf16.mxu0 0
    %638 = vmatmul.mubr.bf16.gmra.mxu0 %v164
    %v639 = vpop.f32.mrf.mxu0
    %v640 = vadd.f32 0.0, %v639
    %v641 = vpop.f32.mrf.mxu0
    %v642 = vpop.f32.mrf.mxu0
    %v643 = vadd.f32 0.0, %v642
    %v644 = vpop.f32.mrf.mxu0
    %645 = vmatprep.mubr.bf16.mxu0 0
    %646 = vmatmul.mubr.bf16.gmra.mxu0 %v167
    %v647 = vpop.f32.mrf.mxu0
    %v648 = vadd.f32 0.0, %v647
    %v649 = vpop.f32.mrf.mxu0
    %v650 = vpop.f32.mrf.mxu0
    %v651 = vadd.f32 0.0, %v650
    %v652 = vpop.f32.mrf.mxu0
    %653 = vmatprep.mubr.bf16.mxu0 0
    %654 = vmatmul.mubr.bf16.gmra.mxu0 %v170
    %v655 = vpop.f32.mrf.mxu0
    %v656 = vadd.f32 0.0, %v655
    %v657 = vpop.f32.mrf.mxu0
    %v658 = vpop.f32.mrf.mxu0
    %v659 = vadd.f32 0.0, %v658
    %v660 = vpop.f32.mrf.mxu0
    %661 = vmatprep.mubr.bf16.mxu0 0
    %662 = vmatmul.mubr.bf16.gmra.mxu0 %v173
    %v663 = vpop.f32.mrf.mxu0
    %v664 = vadd.f32 0.0, %v663
    %v665 = vpop.f32.mrf.mxu0
    %v666 = vpop.f32.mrf.mxu0
    %v667 = vadd.f32 0.0, %v666
    %v668 = vpop.f32.mrf.mxu0
    %669 = vmatprep.mubr.bf16.mxu0 0
    %670 = vmatmul.mubr.bf16.gmra.mxu0 %v176
    %v671 = vpop.f32.mrf.mxu0
    %v672 = vadd.f32 0.0, %v671
    %v673 = vpop.f32.mrf.mxu0
    %v674 = vpop.f32.mrf.mxu0
    %v675 = vadd.f32 0.0, %v674
    %v676 = vpop.f32.mrf.mxu0
    %677 = vdwg.mxu0
    %v678 = vmul.f32 %v220, %v284
    %v679 = vmul.f32 %v223, %v287
    %v680 = vmul.f32 %v228, %v292
    %v681 = vmul.f32 %v231, %v295
    %v682 = vmul.f32 %v236, %v300
    %v683 = vmul.f32 %v239, %v303
    %v684 = vmul.f32 %v244, %v308
    %v685 = vmul.f32 %v247, %v311
    %v686 = vmul.f32 %v252, %v316
    %v687 = vmul.f32 %v255, %v319
    %v688 = vmul.f32 %v260, %v324
    %v689 = vmul.f32 %v263, %v327
    %v690 = vmul.f32 %v268, %v332
    %v691 = vmul.f32 %v271, %v335
    %v692 = vmul.f32 %v276, %v340
    %v693 = vmul.f32 %v279, %v343
    %v694 = vmul.f32 %v386, %v450
    %v695 = vmul.f32 %v389, %v453
    %v696 = vmul.f32 %v394, %v458
    %v697 = vmul.f32 %v397, %v461
    %v698 = vmul.f32 %v402, %v466
    %v699 = vmul.f32 %v405, %v469
    %v700 = vmul.f32 %v410, %v474
    %v701 = vmul.f32 %v413, %v477
    %v702 = vmul.f32 %v418, %v482
    %v703 = vmul.f32 %v421, %v485
    %v704 = vmul.f32 %v426, %v490
    %v705 = vmul.f32 %v429, %v493
    %v706 = vmul.f32 %v434, %v498
    %v707 = vmul.f32 %v437, %v501
    %v708 = vmul.f32 %v442, %v506
    %v709 = vmul.f32 %v445, %v509
    %v710 = vadd.f32 %v678, %v694
    %v711 = vadd.f32 %v679, %v695
    %v712 = vadd.f32 %v680, %v696
    %v713 = vadd.f32 %v681, %v697
    %v714 = vadd.f32 %v682, %v698
    %v715 = vadd.f32 %v683, %v699
    %v716 = vadd.f32 %v684, %v700
    %v717 = vadd.f32 %v685, %v701
    %v718 = vadd.f32 %v686, %v702
    %v719 = vadd.f32 %v687, %v703
    %v720 = vadd.f32 %v688, %v704
    %v721 = vadd.f32 %v689, %v705
    %v722 = vadd.f32 %v690, %v706
    %v723 = vadd.f32 %v691, %v707
    %v724 = vadd.f32 %v692, %v708
    %v725 = vadd.f32 %v693, %v709
    %v726 = vmul.f32 %v552, %v616
    %v727 = vmul.f32 %v555, %v619
    %v728 = vmul.f32 %v560, %v624
    %v729 = vmul.f32 %v563, %v627
    %v730 = vmul.f32 %v568, %v632
    %v731 = vmul.f32 %v571, %v635
    %v732 = vmul.f32 %v576, %v640
    %v733 = vmul.f32 %v579, %v643
    %v734 = vmul.f32 %v584, %v648
    %v735 = vmul.f32 %v587, %v651
    %v736 = vmul.f32 %v592, %v656
    %v737 = vmul.f32 %v595, %v659
    %v738 = vmul.f32 %v600, %v664
    %v739 = vmul.f32 %v603, %v667
    %v740 = vmul.f32 %v608, %v672
    %v741 = vmul.f32 %v611, %v675
    %v742 = vadd.f32 %v710, %v726
    %v743 = vadd.f32 %v711, %v727
    %v744 = vadd.f32 %v712, %v728
    %v745 = vadd.f32 %v713, %v729
    %v746 = vadd.f32 %v714, %v730
    %v747 = vadd.f32 %v715, %v731
    %v748 = vadd.f32 %v716, %v732
    %v749 = vadd.f32 %v717, %v733
    %v750 = vadd.f32 %v718, %v734
    %v751 = vadd.f32 %v719, %v735
    %v752 = vadd.f32 %v720, %v736
    %v753 = vadd.f32 %v721, %v737
    %v754 = vadd.f32 %v722, %v738
    %v755 = vadd.f32 %v723, %v739
    %v756 = vadd.f32 %v724, %v740
    %v757 = vadd.f32 %v725, %v741
    %v758 = vmul.f32 %v284, %v284
    %v759 = vmul.f32 %v287, %v287
    %v760 = vmul.f32 %v292, %v292
    %v761 = vmul.f32 %v295, %v295
    %v762 = vmul.f32 %v300, %v300
    %v763 = vmul.f32 %v303, %v303
    %v764 = vmul.f32 %v308, %v308
    %v765 = vmul.f32 %v311, %v311
    %v766 = vmul.f32 %v316, %v316
    %v767 = vmul.f32 %v319, %v319
    %v768 = vmul.f32 %v324, %v324
    %v769 = vmul.f32 %v327, %v327
    %v770 = vmul.f32 %v332, %v332
    %v771 = vmul.f32 %v335, %v335
    %v772 = vmul.f32 %v340, %v340
    %v773 = vmul.f32 %v343, %v343
    %v774 = vmul.f32 %v450, %v450
    %v775 = vmul.f32 %v453, %v453
    %v776 = vmul.f32 %v458, %v458
    %v777 = vmul.f32 %v461, %v461
    %v778 = vmul.f32 %v466, %v466
    %v779 = vmul.f32 %v469, %v469
    %v780 = vmul.f32 %v474, %v474
    %v781 = vmul.f32 %v477, %v477
    %v782 = vmul.f32 %v482, %v482
    %v783 = vmul.f32 %v485, %v485
    %v784 = vmul.f32 %v490, %v490
    %v785 = vmul.f32 %v493, %v493
    %v786 = vmul.f32 %v498, %v498
    %v787 = vmul.f32 %v501, %v501
    %v788 = vmul.f32 %v506, %v506
    %v789 = vmul.f32 %v509, %v509
    %v790 = vadd.f32 %v758, %v774
    %v791 = vadd.f32 %v759, %v775
    %v792 = vadd.f32 %v760, %v776
    %v793 = vadd.f32 %v761, %v777
    %v794 = vadd.f32 %v762, %v778
    %v795 = vadd.f32 %v763, %v779
    %v796 = vadd.f32 %v764, %v780
    %v797 = vadd.f32 %v765, %v781
    %v798 = vadd.f32 %v766, %v782
    %v799 = vadd.f32 %v767, %v783
    %v800 = vadd.f32 %v768, %v784
    %v801 = vadd.f32 %v769, %v785
    %v802 = vadd.f32 %v770, %v786
    %v803 = vadd.f32 %v771, %v787
    %v804 = vadd.f32 %v772, %v788
    %v805 = vadd.f32 %v773, %v789
    %v806 = vmul.f32 %v616, %v616
    %v807 = vmul.f32 %v619, %v619
    %v808 = vmul.f32 %v624, %v624
    %v809 = vmul.f32 %v627, %v627
    %v810 = vmul.f32 %v632, %v632
    %v811 = vmul.f32 %v635, %v635
    %v812 = vmul.f32 %v640, %v640
    %v813 = vmul.f32 %v643, %v643
    %v814 = vmul.f32 %v648, %v648
    %v815 = vmul.f32 %v651, %v651
    %v816 = vmul.f32 %v656, %v656
    %v817 = vmul.f32 %v659, %v659
    %v818 = vmul.f32 %v664, %v664
    %v819 = vmul.f32 %v667, %v667
    %v820 = vmul.f32 %v672, %v672
    %v821 = vmul.f32 %v675, %v675
    %v822 = vadd.f32 %v790, %v806
    %v823 = vadd.f32 %v791, %v807
    %v824 = vadd.f32 %v792, %v808
    %v825 = vadd.f32 %v793, %v809
    %v826 = vadd.f32 %v794, %v810
    %v827 = vadd.f32 %v795, %v811
    %v828 = vadd.f32 %v796, %v812
    %v829 = vadd.f32 %v797, %v813
    %v830 = vadd.f32 %v798, %v814
    %v831 = vadd.f32 %v799, %v815
    %v832 = vadd.f32 %v800, %v816
    %v833 = vadd.f32 %v801, %v817
    %v834 = vadd.f32 %v802, %v818
    %v835 = vadd.f32 %v803, %v819
    %v836 = vadd.f32 %v804, %v820
    %v837 = vadd.f32 %v805, %v821
    %vm838 = vcmp.lt.f32.partialorder %v742, 0.0
    %vm839 = vcmp.lt.f32.partialorder %v743, 0.0
    %vm840 = vcmp.lt.f32.partialorder %v744, 0.0
    %vm841 = vcmp.lt.f32.partialorder %v745, 0.0
    %vm842 = vcmp.lt.f32.partialorder %v746, 0.0
    %vm843 = vcmp.lt.f32.partialorder %v747, 0.0
    %vm844 = vcmp.lt.f32.partialorder %v748, 0.0
    %vm845 = vcmp.lt.f32.partialorder %v749, 0.0
    %vm846 = vcmp.lt.f32.partialorder %v750, 0.0
    %vm847 = vcmp.lt.f32.partialorder %v751, 0.0
    %vm848 = vcmp.lt.f32.partialorder %v752, 0.0
    %vm849 = vcmp.lt.f32.partialorder %v753, 0.0
    %vm850 = vcmp.lt.f32.partialorder %v754, 0.0
    %vm851 = vcmp.lt.f32.partialorder %v755, 0.0
    %vm852 = vcmp.lt.f32.partialorder %v756, 0.0
    %vm853 = vcmp.lt.f32.partialorder %v757, 0.0
    %v854 = vadd.f32 %v822, 1e-06
    %v855 = vadd.f32 %v823, 1e-06
    %v856 = vadd.f32 %v824, 1e-06
    %v857 = vadd.f32 %v825, 1e-06
    %v858 = vadd.f32 %v826, 1e-06
    %v859 = vadd.f32 %v827, 1e-06
    %v860 = vadd.f32 %v828, 1e-06
    %v861 = vadd.f32 %v829, 1e-06
    %v862 = vadd.f32 %v830, 1e-06
    %v863 = vadd.f32 %v831, 1e-06
    %v864 = vadd.f32 %v832, 1e-06
    %v865 = vadd.f32 %v833, 1e-06
    %v866 = vadd.f32 %v834, 1e-06
    %v867 = vadd.f32 %v835, 1e-06
    %v868 = vadd.f32 %v836, 1e-06
    %v869 = vadd.f32 %v837, 1e-06
    %v870 = vrcp.pop %v854
    %v871 = vrcp.pop %v855
    %v872 = vrcp.pop %v856
    %v873 = vrcp.pop %v857
    %v874 = vrcp.pop %v858
    %v875 = vrcp.pop %v859
    %v876 = vrcp.pop %v860
    %v877 = vrcp.pop %v861
    %v878 = vrcp.pop %v862
    %v879 = vrcp.pop %v863
    %v880 = vrcp.pop %v864
    %v881 = vrcp.pop %v865
    %v882 = vrcp.pop %v866
    %v883 = vrcp.pop %v867
    %v884 = vrcp.pop %v868
    %v885 = vrcp.pop %v869
    %v886 = vmul.f32 %v742, %v870
    %v887 = vmul.f32 %v743, %v871
    %v888 = vmul.f32 %v744, %v872
    %v889 = vmul.f32 %v745, %v873
    %v890 = vmul.f32 %v746, %v874
    %v891 = vmul.f32 %v747, %v875
    %v892 = vmul.f32 %v748, %v876
    %v893 = vmul.f32 %v749, %v877
    %v894 = vmul.f32 %v750, %v878
    %v895 = vmul.f32 %v751, %v879
    %v896 = vmul.f32 %v752, %v880
    %v897 = vmul.f32 %v753, %v881
    %v898 = vmul.f32 %v754, %v882
    %v899 = vmul.f32 %v755, %v883
    %v900 = vmul.f32 %v756, %v884
    %v901 = vmul.f32 %v757, %v885
    %v902 = vsel %vm838, %v886, 0.0
    %v903 = vsel %vm839, %v887, 0.0
    %v904 = vsel %vm840, %v888, 0.0
    %v905 = vsel %vm841, %v889, 0.0
    %v906 = vsel %vm842, %v890, 0.0
    %v907 = vsel %vm843, %v891, 0.0
    %v908 = vsel %vm844, %v892, 0.0
    %v909 = vsel %vm845, %v893, 0.0
    %v910 = vsel %vm846, %v894, 0.0
    %v911 = vsel %vm847, %v895, 0.0
    %v912 = vsel %vm848, %v896, 0.0
    %v913 = vsel %vm849, %v897, 0.0
    %v914 = vsel %vm850, %v898, 0.0
    %v915 = vsel %vm851, %v899, 0.0
    %v916 = vsel %vm852, %v900, 0.0
    %v917 = vsel %vm853, %v901, 0.0
    %v918 = vmul.f32 %v902, 0.8
    %v919 = vmul.f32 %v903, 0.8
    %v920 = vmul.f32 %v904, 0.8
    %v921 = vmul.f32 %v905, 0.8
    %v922 = vmul.f32 %v906, 0.8
    %v923 = vmul.f32 %v907, 0.8
    %v924 = vmul.f32 %v908, 0.8
    %v925 = vmul.f32 %v909, 0.8
    %v926 = vmul.f32 %v910, 0.8
    %v927 = vmul.f32 %v911, 0.8
    %v928 = vmul.f32 %v912, 0.8
    %v929 = vmul.f32 %v913, 0.8
    %v930 = vmul.f32 %v914, 0.8
    %v931 = vmul.f32 %v915, 0.8
    %v932 = vmul.f32 %v916, 0.8
    %v933 = vmul.f32 %v917, 0.8
    %v934 = vmul.f32 %v918, %v284
    %v935 = vmul.f32 %v919, %v287
    %v936 = vmul.f32 %v920, %v292
    %v937 = vmul.f32 %v921, %v295
    %v938 = vmul.f32 %v922, %v300
    %v939 = vmul.f32 %v923, %v303
    %v940 = vmul.f32 %v924, %v308
    %v941 = vmul.f32 %v925, %v311
    %v942 = vmul.f32 %v926, %v316
    %v943 = vmul.f32 %v927, %v319
    %v944 = vmul.f32 %v928, %v324
    %v945 = vmul.f32 %v929, %v327
    %v946 = vmul.f32 %v930, %v332
    %v947 = vmul.f32 %v931, %v335
    %v948 = vmul.f32 %v932, %v340
    %v949 = vmul.f32 %v933, %v343
    %v950 = vsub.f32 %v220, %v934
    %v951 = vsub.f32 %v223, %v935
    %v952 = vsub.f32 %v228, %v936
    %v953 = vsub.f32 %v231, %v937
    %v954 = vsub.f32 %v236, %v938
    %v955 = vsub.f32 %v239, %v939
    %v956 = vsub.f32 %v244, %v940
    %v957 = vsub.f32 %v247, %v941
    %v958 = vsub.f32 %v252, %v942
    %v959 = vsub.f32 %v255, %v943
    %v960 = vsub.f32 %v260, %v944
    %v961 = vsub.f32 %v263, %v945
    %v962 = vsub.f32 %v268, %v946
    %v963 = vsub.f32 %v271, %v947
    %v964 = vsub.f32 %v276, %v948
    %v965 = vsub.f32 %v279, %v949
    %982 = vrot.lane.b32.xlu0 %v950, 96
    %v983 = vpop.permute.xlu0 %982
    %984 = vrot.lane.b32.xlu0 %v951, 96
    %v985 = vpop.permute.xlu0 %984
    %986 = vrot.lane.b32.xlu0 %v952, 96
    %v987 = vpop.permute.xlu0 %986
    %988 = vrot.lane.b32.xlu0 %v953, 96
    %v989 = vpop.permute.xlu0 %988
    %990 = vrot.lane.b32.xlu0 %v954, 96
    %v991 = vpop.permute.xlu0 %990
    %992 = vrot.lane.b32.xlu0 %v955, 96
    %v993 = vpop.permute.xlu0 %992
    %994 = vrot.lane.b32.xlu0 %v956, 96
    %v995 = vpop.permute.xlu0 %994
    %996 = vrot.lane.b32.xlu0 %v957, 96
    %v997 = vpop.permute.xlu0 %996
    %998 = vrot.lane.b32.xlu0 %v958, 96
    %v999 = vpop.permute.xlu0 %998
    %1000 = vrot.lane.b32.xlu0 %v959, 96
    %v1001 = vpop.permute.xlu0 %1000
    %1002 = vrot.lane.b32.xlu0 %v960, 96
    %v1003 = vpop.permute.xlu0 %1002
    %1004 = vrot.lane.b32.xlu0 %v961, 96
    %v1005 = vpop.permute.xlu0 %1004
    %1006 = vrot.lane.b32.xlu0 %v962, 96
    %v1007 = vpop.permute.xlu0 %1006
    %1008 = vrot.lane.b32.xlu0 %v963, 96
    %v1009 = vpop.permute.xlu0 %1008
    %1010 = vrot.lane.b32.xlu0 %v964, 96
    %v1011 = vpop.permute.xlu0 %1010
    %1012 = vrot.lane.b32.xlu0 %v965, 96
    %v1013 = vpop.permute.xlu0 %1012
    %v1030 = vadd.f32 %v950, %v983
    %v1031 = vadd.f32 %v951, %v985
    %v1032 = vadd.f32 %v952, %v987
    %v1033 = vadd.f32 %v953, %v989
    %v1034 = vadd.f32 %v954, %v991
    %v1035 = vadd.f32 %v955, %v993
    %v1036 = vadd.f32 %v956, %v995
    %v1037 = vadd.f32 %v957, %v997
    %v1038 = vadd.f32 %v958, %v999
    %v1039 = vadd.f32 %v959, %v1001
    %v1040 = vadd.f32 %v960, %v1003
    %v1041 = vadd.f32 %v961, %v1005
    %v1042 = vadd.f32 %v962, %v1007
    %v1043 = vadd.f32 %v963, %v1009
    %v1044 = vadd.f32 %v964, %v1011
    %v1045 = vadd.f32 %v965, %v1013
    %1046 = vrot.lane.b32.xlu0 %v950, 64
    %v1047 = vpop.permute.xlu0 %1046
    %1048 = vrot.lane.b32.xlu0 %v951, 64
    %v1049 = vpop.permute.xlu0 %1048
    %1050 = vrot.lane.b32.xlu0 %v952, 64
    %v1051 = vpop.permute.xlu0 %1050
    %1052 = vrot.lane.b32.xlu0 %v953, 64
    %v1053 = vpop.permute.xlu0 %1052
    %1054 = vrot.lane.b32.xlu0 %v954, 64
    %v1055 = vpop.permute.xlu0 %1054
    %1056 = vrot.lane.b32.xlu0 %v955, 64
    %v1057 = vpop.permute.xlu0 %1056
    %1058 = vrot.lane.b32.xlu0 %v956, 64
    %v1059 = vpop.permute.xlu0 %1058
    %1060 = vrot.lane.b32.xlu0 %v957, 64
    %v1061 = vpop.permute.xlu0 %1060
    %1062 = vrot.lane.b32.xlu0 %v958, 64
    %v1063 = vpop.permute.xlu0 %1062
    %1064 = vrot.lane.b32.xlu0 %v959, 64
    %v1065 = vpop.permute.xlu0 %1064
    %1066 = vrot.lane.b32.xlu0 %v960, 64
    %v1067 = vpop.permute.xlu0 %1066
    %1068 = vrot.lane.b32.xlu0 %v961, 64
    %v1069 = vpop.permute.xlu0 %1068
    %1070 = vrot.lane.b32.xlu0 %v962, 64
    %v1071 = vpop.permute.xlu0 %1070
    %1072 = vrot.lane.b32.xlu0 %v963, 64
    %v1073 = vpop.permute.xlu0 %1072
    %1074 = vrot.lane.b32.xlu0 %v964, 64
    %v1075 = vpop.permute.xlu0 %1074
    %1076 = vrot.lane.b32.xlu0 %v965, 64
    %v1077 = vpop.permute.xlu0 %1076
    %v1094 = vadd.f32 %v1030, %v1047
    %v1095 = vadd.f32 %v1031, %v1049
    %v1096 = vadd.f32 %v1032, %v1051
    %v1097 = vadd.f32 %v1033, %v1053
    %v1098 = vadd.f32 %v1034, %v1055
    %v1099 = vadd.f32 %v1035, %v1057
    %v1100 = vadd.f32 %v1036, %v1059
    %v1101 = vadd.f32 %v1037, %v1061
    %v1102 = vadd.f32 %v1038, %v1063
    %v1103 = vadd.f32 %v1039, %v1065
    %v1104 = vadd.f32 %v1040, %v1067
    %v1105 = vadd.f32 %v1041, %v1069
    %v1106 = vadd.f32 %v1042, %v1071
    %v1107 = vadd.f32 %v1043, %v1073
    %v1108 = vadd.f32 %v1044, %v1075
    %v1109 = vadd.f32 %v1045, %v1077
    %1110 = vrot.lane.b32.xlu0 %v950, 32
    %v1111 = vpop.permute.xlu0 %1110
    %1112 = vrot.lane.b32.xlu0 %v951, 32
    %v1113 = vpop.permute.xlu0 %1112
    %1114 = vrot.lane.b32.xlu0 %v952, 32
    %v1115 = vpop.permute.xlu0 %1114
    %1116 = vrot.lane.b32.xlu0 %v953, 32
    %v1117 = vpop.permute.xlu0 %1116
    %1118 = vrot.lane.b32.xlu0 %v954, 32
    %v1119 = vpop.permute.xlu0 %1118
    %1120 = vrot.lane.b32.xlu0 %v955, 32
    %v1121 = vpop.permute.xlu0 %1120
    %1122 = vrot.lane.b32.xlu0 %v956, 32
    %v1123 = vpop.permute.xlu0 %1122
    %1124 = vrot.lane.b32.xlu0 %v957, 32
    %v1125 = vpop.permute.xlu0 %1124
    %1126 = vrot.lane.b32.xlu0 %v958, 32
    %v1127 = vpop.permute.xlu0 %1126
    %1128 = vrot.lane.b32.xlu0 %v959, 32
    %v1129 = vpop.permute.xlu0 %1128
    %1130 = vrot.lane.b32.xlu0 %v960, 32
    %v1131 = vpop.permute.xlu0 %1130
    %1132 = vrot.lane.b32.xlu0 %v961, 32
    %v1133 = vpop.permute.xlu0 %1132
    %1134 = vrot.lane.b32.xlu0 %v962, 32
    %v1135 = vpop.permute.xlu0 %1134
    %1136 = vrot.lane.b32.xlu0 %v963, 32
    %v1137 = vpop.permute.xlu0 %1136
    %1138 = vrot.lane.b32.xlu0 %v964, 32
    %v1139 = vpop.permute.xlu0 %1138
    %1140 = vrot.lane.b32.xlu0 %v965, 32
    %v1141 = vpop.permute.xlu0 %1140
    %v1158 = vadd.f32 %v1094, %v1111
    %v1159 = vadd.f32 %v1095, %v1113
    %v1160 = vadd.f32 %v1096, %v1115
    %v1161 = vadd.f32 %v1097, %v1117
    %v1162 = vadd.f32 %v1098, %v1119
    %v1163 = vadd.f32 %v1099, %v1121
    %v1164 = vadd.f32 %v1100, %v1123
    %v1165 = vadd.f32 %v1101, %v1125
    %v1166 = vadd.f32 %v1102, %v1127
    %v1167 = vadd.f32 %v1103, %v1129
    %v1168 = vadd.f32 %v1104, %v1131
    %v1169 = vadd.f32 %v1105, %v1133
    %v1170 = vadd.f32 %v1106, %v1135
    %v1171 = vadd.f32 %v1107, %v1137
    %v1172 = vadd.f32 %v1108, %v1139
    %v1173 = vadd.f32 %v1109, %v1141
    %v1174 = vmul.f32 %v1158, 0.25
    %v1175 = vmul.f32 %v1159, 0.25
    %v1176 = vmul.f32 %v1160, 0.25
    %v1177 = vmul.f32 %v1161, 0.25
    %v1178 = vmul.f32 %v1162, 0.25
    %v1179 = vmul.f32 %v1163, 0.25
    %v1180 = vmul.f32 %v1164, 0.25
    %v1181 = vmul.f32 %v1165, 0.25
    %v1182 = vmul.f32 %v1166, 0.25
    %v1183 = vmul.f32 %v1167, 0.25
    %v1184 = vmul.f32 %v1168, 0.25
    %v1185 = vmul.f32 %v1169, 0.25
    %v1186 = vmul.f32 %v1170, 0.25
    %v1187 = vmul.f32 %v1171, 0.25
    %v1188 = vmul.f32 %v1172, 0.25
    %v1189 = vmul.f32 %v1173, 0.25
    %v1190 = vmul.f32 %v918, %v450
    %v1191 = vmul.f32 %v919, %v453
    %v1192 = vmul.f32 %v920, %v458
    %v1193 = vmul.f32 %v921, %v461
    %v1194 = vmul.f32 %v922, %v466
    %v1195 = vmul.f32 %v923, %v469
    %v1196 = vmul.f32 %v924, %v474
    %v1197 = vmul.f32 %v925, %v477
    %v1198 = vmul.f32 %v926, %v482
    %v1199 = vmul.f32 %v927, %v485
    %v1200 = vmul.f32 %v928, %v490
    %v1201 = vmul.f32 %v929, %v493
    %v1202 = vmul.f32 %v930, %v498
    %v1203 = vmul.f32 %v931, %v501
    %v1204 = vmul.f32 %v932, %v506
    %v1205 = vmul.f32 %v933, %v509
    %v1206 = vsub.f32 %v386, %v1190
    %v1207 = vsub.f32 %v389, %v1191
    %v1208 = vsub.f32 %v394, %v1192
    %v1209 = vsub.f32 %v397, %v1193
    %v1210 = vsub.f32 %v402, %v1194
    %v1211 = vsub.f32 %v405, %v1195
    %v1212 = vsub.f32 %v410, %v1196
    %v1213 = vsub.f32 %v413, %v1197
    %v1214 = vsub.f32 %v418, %v1198
    %v1215 = vsub.f32 %v421, %v1199
    %v1216 = vsub.f32 %v426, %v1200
    %v1217 = vsub.f32 %v429, %v1201
    %v1218 = vsub.f32 %v434, %v1202
    %v1219 = vsub.f32 %v437, %v1203
    %v1220 = vsub.f32 %v442, %v1204
    %v1221 = vsub.f32 %v445, %v1205
    %1238 = vrot.lane.b32.xlu0 %v1206, 96
    %v1239 = vpop.permute.xlu0 %1238
    %1240 = vrot.lane.b32.xlu0 %v1207, 96
    %v1241 = vpop.permute.xlu0 %1240
    %1242 = vrot.lane.b32.xlu0 %v1208, 96
    %v1243 = vpop.permute.xlu0 %1242
    %1244 = vrot.lane.b32.xlu0 %v1209, 96
    %v1245 = vpop.permute.xlu0 %1244
    %1246 = vrot.lane.b32.xlu0 %v1210, 96
    %v1247 = vpop.permute.xlu0 %1246
    %1248 = vrot.lane.b32.xlu0 %v1211, 96
    %v1249 = vpop.permute.xlu0 %1248
    %1250 = vrot.lane.b32.xlu0 %v1212, 96
    %v1251 = vpop.permute.xlu0 %1250
    %1252 = vrot.lane.b32.xlu0 %v1213, 96
    %v1253 = vpop.permute.xlu0 %1252
    %1254 = vrot.lane.b32.xlu0 %v1214, 96
    %v1255 = vpop.permute.xlu0 %1254
    %1256 = vrot.lane.b32.xlu0 %v1215, 96
    %v1257 = vpop.permute.xlu0 %1256
    %1258 = vrot.lane.b32.xlu0 %v1216, 96
    %v1259 = vpop.permute.xlu0 %1258
    %1260 = vrot.lane.b32.xlu0 %v1217, 96
    %v1261 = vpop.permute.xlu0 %1260
    %1262 = vrot.lane.b32.xlu0 %v1218, 96
    %v1263 = vpop.permute.xlu0 %1262
    %1264 = vrot.lane.b32.xlu0 %v1219, 96
    %v1265 = vpop.permute.xlu0 %1264
    %1266 = vrot.lane.b32.xlu0 %v1220, 96
    %v1267 = vpop.permute.xlu0 %1266
    %1268 = vrot.lane.b32.xlu0 %v1221, 96
    %v1269 = vpop.permute.xlu0 %1268
    %v1286 = vadd.f32 %v1206, %v1239
    %v1287 = vadd.f32 %v1207, %v1241
    %v1288 = vadd.f32 %v1208, %v1243
    %v1289 = vadd.f32 %v1209, %v1245
    %v1290 = vadd.f32 %v1210, %v1247
    %v1291 = vadd.f32 %v1211, %v1249
    %v1292 = vadd.f32 %v1212, %v1251
    %v1293 = vadd.f32 %v1213, %v1253
    %v1294 = vadd.f32 %v1214, %v1255
    %v1295 = vadd.f32 %v1215, %v1257
    %v1296 = vadd.f32 %v1216, %v1259
    %v1297 = vadd.f32 %v1217, %v1261
    %v1298 = vadd.f32 %v1218, %v1263
    %v1299 = vadd.f32 %v1219, %v1265
    %v1300 = vadd.f32 %v1220, %v1267
    %v1301 = vadd.f32 %v1221, %v1269
    %1302 = vrot.lane.b32.xlu0 %v1206, 64
    %v1303 = vpop.permute.xlu0 %1302
    %1304 = vrot.lane.b32.xlu0 %v1207, 64
    %v1305 = vpop.permute.xlu0 %1304
    %1306 = vrot.lane.b32.xlu0 %v1208, 64
    %v1307 = vpop.permute.xlu0 %1306
    %1308 = vrot.lane.b32.xlu0 %v1209, 64
    %v1309 = vpop.permute.xlu0 %1308
    %1310 = vrot.lane.b32.xlu0 %v1210, 64
    %v1311 = vpop.permute.xlu0 %1310
    %1312 = vrot.lane.b32.xlu0 %v1211, 64
    %v1313 = vpop.permute.xlu0 %1312
    %1314 = vrot.lane.b32.xlu0 %v1212, 64
    %v1315 = vpop.permute.xlu0 %1314
    %1316 = vrot.lane.b32.xlu0 %v1213, 64
    %v1317 = vpop.permute.xlu0 %1316
    %1318 = vrot.lane.b32.xlu0 %v1214, 64
    %v1319 = vpop.permute.xlu0 %1318
    %1320 = vrot.lane.b32.xlu0 %v1215, 64
    %v1321 = vpop.permute.xlu0 %1320
    %1322 = vrot.lane.b32.xlu0 %v1216, 64
    %v1323 = vpop.permute.xlu0 %1322
    %1324 = vrot.lane.b32.xlu0 %v1217, 64
    %v1325 = vpop.permute.xlu0 %1324
    %1326 = vrot.lane.b32.xlu0 %v1218, 64
    %v1327 = vpop.permute.xlu0 %1326
    %1328 = vrot.lane.b32.xlu0 %v1219, 64
    %v1329 = vpop.permute.xlu0 %1328
    %1330 = vrot.lane.b32.xlu0 %v1220, 64
    %v1331 = vpop.permute.xlu0 %1330
    %1332 = vrot.lane.b32.xlu0 %v1221, 64
    %v1333 = vpop.permute.xlu0 %1332
    %v1350 = vadd.f32 %v1286, %v1303
    %v1351 = vadd.f32 %v1287, %v1305
    %v1352 = vadd.f32 %v1288, %v1307
    %v1353 = vadd.f32 %v1289, %v1309
    %v1354 = vadd.f32 %v1290, %v1311
    %v1355 = vadd.f32 %v1291, %v1313
    %v1356 = vadd.f32 %v1292, %v1315
    %v1357 = vadd.f32 %v1293, %v1317
    %v1358 = vadd.f32 %v1294, %v1319
    %v1359 = vadd.f32 %v1295, %v1321
    %v1360 = vadd.f32 %v1296, %v1323
    %v1361 = vadd.f32 %v1297, %v1325
    %v1362 = vadd.f32 %v1298, %v1327
    %v1363 = vadd.f32 %v1299, %v1329
    %v1364 = vadd.f32 %v1300, %v1331
    %v1365 = vadd.f32 %v1301, %v1333
    %1366 = vrot.lane.b32.xlu0 %v1206, 32
    %v1367 = vpop.permute.xlu0 %1366
    %1368 = vrot.lane.b32.xlu0 %v1207, 32
    %v1369 = vpop.permute.xlu0 %1368
    %1370 = vrot.lane.b32.xlu0 %v1208, 32
    %v1371 = vpop.permute.xlu0 %1370
    %1372 = vrot.lane.b32.xlu0 %v1209, 32
    %v1373 = vpop.permute.xlu0 %1372
    %1374 = vrot.lane.b32.xlu0 %v1210, 32
    %v1375 = vpop.permute.xlu0 %1374
    %1376 = vrot.lane.b32.xlu0 %v1211, 32
    %v1377 = vpop.permute.xlu0 %1376
    %1378 = vrot.lane.b32.xlu0 %v1212, 32
    %v1379 = vpop.permute.xlu0 %1378
    %1380 = vrot.lane.b32.xlu0 %v1213, 32
    %v1381 = vpop.permute.xlu0 %1380
    %1382 = vrot.lane.b32.xlu0 %v1214, 32
    %v1383 = vpop.permute.xlu0 %1382
    %1384 = vrot.lane.b32.xlu0 %v1215, 32
    %v1385 = vpop.permute.xlu0 %1384
    %1386 = vrot.lane.b32.xlu0 %v1216, 32
    %v1387 = vpop.permute.xlu0 %1386
    %1388 = vrot.lane.b32.xlu0 %v1217, 32
    %v1389 = vpop.permute.xlu0 %1388
    %1390 = vrot.lane.b32.xlu0 %v1218, 32
    %v1391 = vpop.permute.xlu0 %1390
    %1392 = vrot.lane.b32.xlu0 %v1219, 32
    %v1393 = vpop.permute.xlu0 %1392
    %1394 = vrot.lane.b32.xlu0 %v1220, 32
    %v1395 = vpop.permute.xlu0 %1394
    %1396 = vrot.lane.b32.xlu0 %v1221, 32
    %v1397 = vpop.permute.xlu0 %1396
    %v1414 = vadd.f32 %v1350, %v1367
    %v1415 = vadd.f32 %v1351, %v1369
    %v1416 = vadd.f32 %v1352, %v1371
    %v1417 = vadd.f32 %v1353, %v1373
    %v1418 = vadd.f32 %v1354, %v1375
    %v1419 = vadd.f32 %v1355, %v1377
    %v1420 = vadd.f32 %v1356, %v1379
    %v1421 = vadd.f32 %v1357, %v1381
    %v1422 = vadd.f32 %v1358, %v1383
    %v1423 = vadd.f32 %v1359, %v1385
    %v1424 = vadd.f32 %v1360, %v1387
    %v1425 = vadd.f32 %v1361, %v1389
    %v1426 = vadd.f32 %v1362, %v1391
    %v1427 = vadd.f32 %v1363, %v1393
    %v1428 = vadd.f32 %v1364, %v1395
    %v1429 = vadd.f32 %v1365, %v1397
    %v1430 = vmul.f32 %v1414, 0.25
    %v1431 = vmul.f32 %v1415, 0.25
    %v1432 = vmul.f32 %v1416, 0.25
    %v1433 = vmul.f32 %v1417, 0.25
    %v1434 = vmul.f32 %v1418, 0.25
    %v1435 = vmul.f32 %v1419, 0.25
    %v1436 = vmul.f32 %v1420, 0.25
    %v1437 = vmul.f32 %v1421, 0.25
    %v1438 = vmul.f32 %v1422, 0.25
    %v1439 = vmul.f32 %v1423, 0.25
    %v1440 = vmul.f32 %v1424, 0.25
    %v1441 = vmul.f32 %v1425, 0.25
    %v1442 = vmul.f32 %v1426, 0.25
    %v1443 = vmul.f32 %v1427, 0.25
    %v1444 = vmul.f32 %v1428, 0.25
    %v1445 = vmul.f32 %v1429, 0.25
    %v1446 = vmul.f32 %v918, %v616
    %v1447 = vmul.f32 %v919, %v619
    %v1448 = vmul.f32 %v920, %v624
    %v1449 = vmul.f32 %v921, %v627
    %v1450 = vmul.f32 %v922, %v632
    %v1451 = vmul.f32 %v923, %v635
    %v1452 = vmul.f32 %v924, %v640
    %v1453 = vmul.f32 %v925, %v643
    %v1454 = vmul.f32 %v926, %v648
    %v1455 = vmul.f32 %v927, %v651
    %v1456 = vmul.f32 %v928, %v656
    %v1457 = vmul.f32 %v929, %v659
    %v1458 = vmul.f32 %v930, %v664
    %v1459 = vmul.f32 %v931, %v667
    %v1460 = vmul.f32 %v932, %v672
    %v1461 = vmul.f32 %v933, %v675
    %v1462 = vsub.f32 %v552, %v1446
    %v1463 = vsub.f32 %v555, %v1447
    %v1464 = vsub.f32 %v560, %v1448
    %v1465 = vsub.f32 %v563, %v1449
    %v1466 = vsub.f32 %v568, %v1450
    %v1467 = vsub.f32 %v571, %v1451
    %v1468 = vsub.f32 %v576, %v1452
    %v1469 = vsub.f32 %v579, %v1453
    %v1470 = vsub.f32 %v584, %v1454
    %v1471 = vsub.f32 %v587, %v1455
    %v1472 = vsub.f32 %v592, %v1456
    %v1473 = vsub.f32 %v595, %v1457
    %v1474 = vsub.f32 %v600, %v1458
    %v1475 = vsub.f32 %v603, %v1459
    %v1476 = vsub.f32 %v608, %v1460
    %v1477 = vsub.f32 %v611, %v1461
    %1494 = vrot.lane.b32.xlu0 %v1462, 96
    %v1495 = vpop.permute.xlu0 %1494
    %1496 = vrot.lane.b32.xlu0 %v1463, 96
    %v1497 = vpop.permute.xlu0 %1496
    %1498 = vrot.lane.b32.xlu0 %v1464, 96
    %v1499 = vpop.permute.xlu0 %1498
    %1500 = vrot.lane.b32.xlu0 %v1465, 96
    %v1501 = vpop.permute.xlu0 %1500
    %1502 = vrot.lane.b32.xlu0 %v1466, 96
    %v1503 = vpop.permute.xlu0 %1502
    %1504 = vrot.lane.b32.xlu0 %v1467, 96
    %v1505 = vpop.permute.xlu0 %1504
    %1506 = vrot.lane.b32.xlu0 %v1468, 96
    %v1507 = vpop.permute.xlu0 %1506
    %1508 = vrot.lane.b32.xlu0 %v1469, 96
    %v1509 = vpop.permute.xlu0 %1508
    %1510 = vrot.lane.b32.xlu0 %v1470, 96
    %v1511 = vpop.permute.xlu0 %1510
    %1512 = vrot.lane.b32.xlu0 %v1471, 96
    %v1513 = vpop.permute.xlu0 %1512
    %1514 = vrot.lane.b32.xlu0 %v1472, 96
    %v1515 = vpop.permute.xlu0 %1514
    %1516 = vrot.lane.b32.xlu0 %v1473, 96
    %v1517 = vpop.permute.xlu0 %1516
    %1518 = vrot.lane.b32.xlu0 %v1474, 96
    %v1519 = vpop.permute.xlu0 %1518
    %1520 = vrot.lane.b32.xlu0 %v1475, 96
    %v1521 = vpop.permute.xlu0 %1520
    %1522 = vrot.lane.b32.xlu0 %v1476, 96
    %v1523 = vpop.permute.xlu0 %1522
    %1524 = vrot.lane.b32.xlu0 %v1477, 96
    %v1525 = vpop.permute.xlu0 %1524
    %v1542 = vadd.f32 %v1462, %v1495
    %v1543 = vadd.f32 %v1463, %v1497
    %v1544 = vadd.f32 %v1464, %v1499
    %v1545 = vadd.f32 %v1465, %v1501
    %v1546 = vadd.f32 %v1466, %v1503
    %v1547 = vadd.f32 %v1467, %v1505
    %v1548 = vadd.f32 %v1468, %v1507
    %v1549 = vadd.f32 %v1469, %v1509
    %v1550 = vadd.f32 %v1470, %v1511
    %v1551 = vadd.f32 %v1471, %v1513
    %v1552 = vadd.f32 %v1472, %v1515
    %v1553 = vadd.f32 %v1473, %v1517
    %v1554 = vadd.f32 %v1474, %v1519
    %v1555 = vadd.f32 %v1475, %v1521
    %v1556 = vadd.f32 %v1476, %v1523
    %v1557 = vadd.f32 %v1477, %v1525
    %1558 = vrot.lane.b32.xlu0 %v1462, 64
    %v1559 = vpop.permute.xlu0 %1558
    %1560 = vrot.lane.b32.xlu0 %v1463, 64
    %v1561 = vpop.permute.xlu0 %1560
    %1562 = vrot.lane.b32.xlu0 %v1464, 64
    %v1563 = vpop.permute.xlu0 %1562
    %1564 = vrot.lane.b32.xlu0 %v1465, 64
    %v1565 = vpop.permute.xlu0 %1564
    %1566 = vrot.lane.b32.xlu0 %v1466, 64
    %v1567 = vpop.permute.xlu0 %1566
    %1568 = vrot.lane.b32.xlu0 %v1467, 64
    %v1569 = vpop.permute.xlu0 %1568
    %1570 = vrot.lane.b32.xlu0 %v1468, 64
    %v1571 = vpop.permute.xlu0 %1570
    %1572 = vrot.lane.b32.xlu0 %v1469, 64
    %v1573 = vpop.permute.xlu0 %1572
    %1574 = vrot.lane.b32.xlu0 %v1470, 64
    %v1575 = vpop.permute.xlu0 %1574
    %1576 = vrot.lane.b32.xlu0 %v1471, 64
    %v1577 = vpop.permute.xlu0 %1576
    %1578 = vrot.lane.b32.xlu0 %v1472, 64
    %v1579 = vpop.permute.xlu0 %1578
    %1580 = vrot.lane.b32.xlu0 %v1473, 64
    %v1581 = vpop.permute.xlu0 %1580
    %1582 = vrot.lane.b32.xlu0 %v1474, 64
    %v1583 = vpop.permute.xlu0 %1582
    %1584 = vrot.lane.b32.xlu0 %v1475, 64
    %v1585 = vpop.permute.xlu0 %1584
    %1586 = vrot.lane.b32.xlu0 %v1476, 64
    %v1587 = vpop.permute.xlu0 %1586
    %1588 = vrot.lane.b32.xlu0 %v1477, 64
    %v1589 = vpop.permute.xlu0 %1588
    %v1606 = vadd.f32 %v1542, %v1559
    %v1607 = vadd.f32 %v1543, %v1561
    %v1608 = vadd.f32 %v1544, %v1563
    %v1609 = vadd.f32 %v1545, %v1565
    %v1610 = vadd.f32 %v1546, %v1567
    %v1611 = vadd.f32 %v1547, %v1569
    %v1612 = vadd.f32 %v1548, %v1571
    %v1613 = vadd.f32 %v1549, %v1573
    %v1614 = vadd.f32 %v1550, %v1575
    %v1615 = vadd.f32 %v1551, %v1577
    %v1616 = vadd.f32 %v1552, %v1579
    %v1617 = vadd.f32 %v1553, %v1581
    %v1618 = vadd.f32 %v1554, %v1583
    %v1619 = vadd.f32 %v1555, %v1585
    %v1620 = vadd.f32 %v1556, %v1587
    %v1621 = vadd.f32 %v1557, %v1589
    %1622 = vrot.lane.b32.xlu0 %v1462, 32
    %v1623 = vpop.permute.xlu0 %1622
    %1624 = vrot.lane.b32.xlu0 %v1463, 32
    %v1625 = vpop.permute.xlu0 %1624
    %1626 = vrot.lane.b32.xlu0 %v1464, 32
    %v1627 = vpop.permute.xlu0 %1626
    %1628 = vrot.lane.b32.xlu0 %v1465, 32
    %v1629 = vpop.permute.xlu0 %1628
    %1630 = vrot.lane.b32.xlu0 %v1466, 32
    %v1631 = vpop.permute.xlu0 %1630
    %1632 = vrot.lane.b32.xlu0 %v1467, 32
    %v1633 = vpop.permute.xlu0 %1632
    %1634 = vrot.lane.b32.xlu0 %v1468, 32
    %v1635 = vpop.permute.xlu0 %1634
    %1636 = vrot.lane.b32.xlu0 %v1469, 32
    %v1637 = vpop.permute.xlu0 %1636
    %1638 = vrot.lane.b32.xlu0 %v1470, 32
    %v1639 = vpop.permute.xlu0 %1638
    %1640 = vrot.lane.b32.xlu0 %v1471, 32
    %v1641 = vpop.permute.xlu0 %1640
    %1642 = vrot.lane.b32.xlu0 %v1472, 32
    %v1643 = vpop.permute.xlu0 %1642
    %1644 = vrot.lane.b32.xlu0 %v1473, 32
    %v1645 = vpop.permute.xlu0 %1644
    %1646 = vrot.lane.b32.xlu0 %v1474, 32
    %v1647 = vpop.permute.xlu0 %1646
    %1648 = vrot.lane.b32.xlu0 %v1475, 32
    %v1649 = vpop.permute.xlu0 %1648
    %1650 = vrot.lane.b32.xlu0 %v1476, 32
    %v1651 = vpop.permute.xlu0 %1650
    %1652 = vrot.lane.b32.xlu0 %v1477, 32
    %v1653 = vpop.permute.xlu0 %1652
    %v1670 = vadd.f32 %v1606, %v1623
    %v1671 = vadd.f32 %v1607, %v1625
    %v1672 = vadd.f32 %v1608, %v1627
    %v1673 = vadd.f32 %v1609, %v1629
    %v1674 = vadd.f32 %v1610, %v1631
    %v1675 = vadd.f32 %v1611, %v1633
    %v1676 = vadd.f32 %v1612, %v1635
    %v1677 = vadd.f32 %v1613, %v1637
    %v1678 = vadd.f32 %v1614, %v1639
    %v1679 = vadd.f32 %v1615, %v1641
    %v1680 = vadd.f32 %v1616, %v1643
    %v1681 = vadd.f32 %v1617, %v1645
    %v1682 = vadd.f32 %v1618, %v1647
    %v1683 = vadd.f32 %v1619, %v1649
    %v1684 = vadd.f32 %v1620, %v1651
    %v1685 = vadd.f32 %v1621, %v1653
    %v1686 = vmul.f32 %v1670, 0.25
    %v1687 = vmul.f32 %v1671, 0.25
    %v1688 = vmul.f32 %v1672, 0.25
    %v1689 = vmul.f32 %v1673, 0.25
    %v1690 = vmul.f32 %v1674, 0.25
    %v1691 = vmul.f32 %v1675, 0.25
    %v1692 = vmul.f32 %v1676, 0.25
    %v1693 = vmul.f32 %v1677, 0.25
    %v1694 = vmul.f32 %v1678, 0.25
    %v1695 = vmul.f32 %v1679, 0.25
    %v1696 = vmul.f32 %v1680, 0.25
    %v1697 = vmul.f32 %v1681, 0.25
    %v1698 = vmul.f32 %v1682, 0.25
    %v1699 = vmul.f32 %v1683, 0.25
    %v1700 = vmul.f32 %v1684, 0.25
    %v1701 = vmul.f32 %v1685, 0.25
    %1718 = vrot.lane.b32.xlu0 %v1430, 32
    %v1719 = vpop.permute.xlu0 %1718
    %1720 = vrot.lane.b32.xlu0 %v1431, 32
    %v1721 = vpop.permute.xlu0 %1720
    %1722 = vrot.lane.b32.xlu0 %v1432, 32
    %v1723 = vpop.permute.xlu0 %1722
    %1724 = vrot.lane.b32.xlu0 %v1433, 32
    %v1725 = vpop.permute.xlu0 %1724
    %1726 = vrot.lane.b32.xlu0 %v1434, 32
    %v1727 = vpop.permute.xlu0 %1726
    %1728 = vrot.lane.b32.xlu0 %v1435, 32
    %v1729 = vpop.permute.xlu0 %1728
    %1730 = vrot.lane.b32.xlu0 %v1436, 32
    %v1731 = vpop.permute.xlu0 %1730
    %1732 = vrot.lane.b32.xlu0 %v1437, 32
    %v1733 = vpop.permute.xlu0 %1732
    %1734 = vrot.lane.b32.xlu0 %v1438, 32
    %v1735 = vpop.permute.xlu0 %1734
    %1736 = vrot.lane.b32.xlu0 %v1439, 32
    %v1737 = vpop.permute.xlu0 %1736
    %1738 = vrot.lane.b32.xlu0 %v1440, 32
    %v1739 = vpop.permute.xlu0 %1738
    %1740 = vrot.lane.b32.xlu0 %v1441, 32
    %v1741 = vpop.permute.xlu0 %1740
    %1742 = vrot.lane.b32.xlu0 %v1442, 32
    %v1743 = vpop.permute.xlu0 %1742
    %1744 = vrot.lane.b32.xlu0 %v1443, 32
    %v1745 = vpop.permute.xlu0 %1744
    %1746 = vrot.lane.b32.xlu0 %v1444, 32
    %v1747 = vpop.permute.xlu0 %1746
    %1748 = vrot.lane.b32.xlu0 %v1445, 32
    %v1749 = vpop.permute.xlu0 %1748
    %1782 = vrot.lane.b32.xlu0 %v1686, 64
    %v1783 = vpop.permute.xlu0 %1782
    %1784 = vrot.lane.b32.xlu0 %v1687, 64
    %v1785 = vpop.permute.xlu0 %1784
    %1786 = vrot.lane.b32.xlu0 %v1688, 64
    %v1787 = vpop.permute.xlu0 %1786
    %1788 = vrot.lane.b32.xlu0 %v1689, 64
    %v1789 = vpop.permute.xlu0 %1788
    %1790 = vrot.lane.b32.xlu0 %v1690, 64
    %v1791 = vpop.permute.xlu0 %1790
    %1792 = vrot.lane.b32.xlu0 %v1691, 64
    %v1793 = vpop.permute.xlu0 %1792
    %1794 = vrot.lane.b32.xlu0 %v1692, 64
    %v1795 = vpop.permute.xlu0 %1794
    %1796 = vrot.lane.b32.xlu0 %v1693, 64
    %v1797 = vpop.permute.xlu0 %1796
    %1798 = vrot.lane.b32.xlu0 %v1694, 64
    %v1799 = vpop.permute.xlu0 %1798
    %1800 = vrot.lane.b32.xlu0 %v1695, 64
    %v1801 = vpop.permute.xlu0 %1800
    %1802 = vrot.lane.b32.xlu0 %v1696, 64
    %v1803 = vpop.permute.xlu0 %1802
    %1804 = vrot.lane.b32.xlu0 %v1697, 64
    %v1805 = vpop.permute.xlu0 %1804
    %1806 = vrot.lane.b32.xlu0 %v1698, 64
    %v1807 = vpop.permute.xlu0 %1806
    %1808 = vrot.lane.b32.xlu0 %v1699, 64
    %v1809 = vpop.permute.xlu0 %1808
    %1810 = vrot.lane.b32.xlu0 %v1700, 64
    %v1811 = vpop.permute.xlu0 %1810
    %1812 = vrot.lane.b32.xlu0 %v1701, 64
    %v1813 = vpop.permute.xlu0 %1812
    %vm1830 = vcmask 261120
    %v1831 = vsel %vm1830, %v1174, %v1719
    %v1832 = vsel %vm1830, %v1175, %v1721
    %v1833 = vsel %vm1830, %v1176, %v1723
    %v1834 = vsel %vm1830, %v1177, %v1725
    %v1835 = vsel %vm1830, %v1178, %v1727
    %v1836 = vsel %vm1830, %v1179, %v1729
    %v1837 = vsel %vm1830, %v1180, %v1731
    %v1838 = vsel %vm1830, %v1181, %v1733
    %v1839 = vsel %vm1830, %v1182, %v1735
    %v1840 = vsel %vm1830, %v1183, %v1737
    %v1841 = vsel %vm1830, %v1184, %v1739
    %v1842 = vsel %vm1830, %v1185, %v1741
    %v1843 = vsel %vm1830, %v1186, %v1743
    %v1844 = vsel %vm1830, %v1187, %v1745
    %v1845 = vsel %vm1830, %v1188, %v1747
    %v1846 = vsel %vm1830, %v1189, %v1749
    %vm1847 = vcmask 523264
    %v1848 = vsel %vm1847, %v1831, %v1783
    %v1849 = vsel %vm1847, %v1832, %v1785
    %v1850 = vsel %vm1847, %v1833, %v1787
    %v1851 = vsel %vm1847, %v1834, %v1789
    %v1852 = vsel %vm1847, %v1835, %v1791
    %v1853 = vsel %vm1847, %v1836, %v1793
    %v1854 = vsel %vm1847, %v1837, %v1795
    %v1855 = vsel %vm1847, %v1838, %v1797
    %v1856 = vsel %vm1847, %v1839, %v1799
    %v1857 = vsel %vm1847, %v1840, %v1801
    %v1858 = vsel %vm1847, %v1841, %v1803
    %v1859 = vsel %vm1847, %v1842, %v1805
    %v1860 = vsel %vm1847, %v1843, %v1807
    %v1861 = vsel %vm1847, %v1844, %v1809
    %v1862 = vsel %vm1847, %v1845, %v1811
    %v1863 = vsel %vm1847, %v1846, %v1813
    %v1864 = vpack.c.bf16 %v1849, %v1848
    %v1865 = vpack.c.bf16 %v1851, %v1850
    %v1866 = vpack.c.bf16 %v1853, %v1852
    %v1867 = vpack.c.bf16 %v1855, %v1854
    %v1868 = vpack.c.bf16 %v1857, %v1856
    %v1869 = vpack.c.bf16 %v1859, %v1858
    %v1870 = vpack.c.bf16 %v1861, %v1860
    %v1871 = vpack.c.bf16 %v1863, %v1862
    %v1872 = vld [vmem:[%s2] sm:$0xff]
    %v1873 = vld [vmem:[%s2 + $0x8] sm:$0xff]
    %v1874 = vld [vmem:[%s2 + $0x10] sm:$0xff]
    %v1875 = vld [vmem:[%s2 + $0x18] sm:$0xff]
    %v1876 = vld [vmem:[%s2 + $0x20] sm:$0xff]
    %v1877 = vld [vmem:[%s2 + $0x28] sm:$0xff]
    %v1878 = vld [vmem:[%s2 + $0x30] sm:$0xff]
    %v1879 = vld [vmem:[%s2 + $0x38] sm:$0xff]
    %v1880 = vld [vmem:[%s2 + $0x40] sm:$0xff]
    %v1881 = vld [vmem:[%s2 + $0x48] sm:$0xff]
    %v1882 = vld [vmem:[%s2 + $0x50] sm:$0xff]
    %v1883 = vld [vmem:[%s2 + $0x58] sm:$0xff]
    %v1884 = vld [vmem:[%s2 + $0x60] sm:$0xff]
    %v1885 = vld [vmem:[%s2 + $0x68] sm:$0xff]
    %v1886 = vld [vmem:[%s2 + $0x70] sm:$0xff]
    %v1887 = vld [vmem:[%s2 + $0x78] sm:$0xff]
    %1888 = vxpose.xlu0.c.b16.start [1/8] %v1864, 128
    %1889 = vxpose.xlu0.c.b16.cont [2/8] %v1865, 128
    %1890 = vxpose.xlu0.c.b16.cont [3/8] %v1866, 128
    %1891 = vxpose.xlu0.c.b16.cont [4/8] %v1867, 128
    %1892 = vxpose.xlu0.c.b16.cont [5/8] %v1868, 128
    %1893 = vxpose.xlu0.c.b16.cont [6/8] %v1869, 128
    %1894 = vxpose.xlu0.c.b16.cont [7/8] %v1870, 128
    %1895 = vxpose.xlu0.c.b16.end [8/8] %v1871, 128
    %v1896 = vpop.trf.xlu0
    %v1897 = vpop.trf.xlu0
    %v1898 = vpop.trf.xlu0
    %v1899 = vpop.trf.xlu0
    %v1900 = vpop.trf.xlu0
    %v1901 = vpop.trf.xlu0
    %v1902 = vpop.trf.xlu0
    %v1903 = vpop.trf.xlu0
    %v1920 = vunpack.c.l.b16 %v1872
    %v1921 = vunpack.c.h.b16 %v1872
    %v1922 = vunpack.c.l.b16 %v1873
    %v1923 = vunpack.c.h.b16 %v1873
    %v1924 = vunpack.c.l.b16 %v1874
    %v1925 = vunpack.c.h.b16 %v1874
    %v1926 = vunpack.c.l.b16 %v1875
    %v1927 = vunpack.c.h.b16 %v1875
    %v1928 = vunpack.c.l.b16 %v1876
    %v1929 = vunpack.c.h.b16 %v1876
    %v1930 = vunpack.c.l.b16 %v1877
    %v1931 = vunpack.c.h.b16 %v1877
    %v1932 = vunpack.c.l.b16 %v1878
    %v1933 = vunpack.c.h.b16 %v1878
    %v1934 = vunpack.c.l.b16 %v1879
    %v1935 = vunpack.c.h.b16 %v1879
    %v1936 = vunpack.c.l.b16 %v1880
    %v1937 = vunpack.c.h.b16 %v1880
    %v1938 = vunpack.c.l.b16 %v1881
    %v1939 = vunpack.c.h.b16 %v1881
    %v1940 = vunpack.c.l.b16 %v1882
    %v1941 = vunpack.c.h.b16 %v1882
    %v1942 = vunpack.c.l.b16 %v1883
    %v1943 = vunpack.c.h.b16 %v1883
    %v1944 = vunpack.c.l.b16 %v1884
    %v1945 = vunpack.c.h.b16 %v1884
    %v1946 = vunpack.c.l.b16 %v1885
    %v1947 = vunpack.c.h.b16 %v1885
    %v1948 = vunpack.c.l.b16 %v1886
    %v1949 = vunpack.c.h.b16 %v1886
    %v1950 = vunpack.c.l.b16 %v1887
    %v1951 = vunpack.c.h.b16 %v1887
    %v1952 = vpack.c.b16 %v1922, %v1920
    %v1953 = vpack.c.b16 %v1923, %v1921
    %v1954 = vpack.c.b16 %v1926, %v1924
    %v1955 = vpack.c.b16 %v1927, %v1925
    %v1956 = vpack.c.b16 %v1930, %v1928
    %v1957 = vpack.c.b16 %v1931, %v1929
    %v1958 = vpack.c.b16 %v1934, %v1932
    %v1959 = vpack.c.b16 %v1935, %v1933
    %v1960 = vpack.c.b16 %v1938, %v1936
    %v1961 = vpack.c.b16 %v1939, %v1937
    %v1962 = vpack.c.b16 %v1942, %v1940
    %v1963 = vpack.c.b16 %v1943, %v1941
    %v1964 = vpack.c.b16 %v1946, %v1944
    %v1965 = vpack.c.b16 %v1947, %v1945
    %v1966 = vpack.c.b16 %v1950, %v1948
    %v1967 = vpack.c.b16 %v1951, %v1949
    %1984 = vmatprep.subr.bf16.mxu0 %v1967
    %1985 = vmatpush1.bf16.msra.mxu0 %v1966
    %1986 = vmatprep.subr.bf16.mxu0 %v1965
    %1987 = vmatpush1.bf16.msra.mxu0 %v1964
    %1988 = vmatprep.subr.bf16.mxu0 %v1963
    %1989 = vmatpush1.bf16.msra.mxu0 %v1962
    %1990 = vmatprep.subr.bf16.mxu0 %v1961
    %1991 = vmatpush1.bf16.msra.mxu0 %v1960
    %1992 = vmatprep.subr.bf16.mxu0 %v1959
    %1993 = vmatpush1.bf16.msra.mxu0 %v1958
    %1994 = vmatprep.subr.bf16.mxu0 %v1957
    %1995 = vmatpush1.bf16.msra.mxu0 %v1956
    %1996 = vmatprep.subr.bf16.mxu0 %v1955
    %1997 = vmatpush1.bf16.msra.mxu0 %v1954
    %1998 = vmatprep.subr.bf16.mxu0 %v1953
    %1999 = vmatpush1.bf16.msra.mxu0 %v1952
    %2000 = vmatprep.subr.bf16.mxu0 0
    %2001 = vmatpush2.bf16.msra.mxu0 0
    %2002 = vmatprep.subr.bf16.mxu0 0
    %2003 = vmatpush2.bf16.msra.mxu0 0
    %2004 = vmatprep.subr.bf16.mxu0 0
    %2005 = vmatpush2.bf16.msra.mxu0 0
    %2006 = vmatprep.subr.bf16.mxu0 0
    %2007 = vmatpush2.bf16.msra.mxu0 0
    %2008 = vmatprep.subr.bf16.mxu0 0
    %2009 = vmatpush2.bf16.msra.mxu0 0
    %2010 = vmatprep.subr.bf16.mxu0 0
    %2011 = vmatpush2.bf16.msra.mxu0 0
    %2012 = vmatprep.subr.bf16.mxu0 0
    %2013 = vmatpush2.bf16.msra.mxu0 0
    %2014 = vmatprep.subr.bf16.mxu0 0
    %2015 = vmatpush2.bf16.msra.mxu0 0
    %2016 = vmatprep.mubr.bf16.mxu0 0
    %2017 = vmatmul.mubr.bf16.gmra.mxu0 %v1896
    %v2018 = vpop.f32.mrf.mxu0
    %v2019 = vadd.f32 0.0, %v2018
    %v2020 = vpop.f32.mrf.mxu0
    %v2021 = vadd.f32 0.0, %v2020
    %v2022 = vpop.f32.mrf.mxu0
    %v2023 = vadd.f32 0.0, %v2022
    %v2024 = vpop.f32.mrf.mxu0
    %v2025 = vadd.f32 0.0, %v2024
    %2026 = vmatprep.mubr.bf16.mxu0 0
    %2027 = vmatmul.mubr.bf16.gmra.mxu0 %v1897
    %v2028 = vpop.f32.mrf.mxu0
    %v2029 = vadd.f32 0.0, %v2028
    %v2030 = vpop.f32.mrf.mxu0
    %v2031 = vadd.f32 0.0, %v2030
    %v2032 = vpop.f32.mrf.mxu0
    %v2033 = vadd.f32 0.0, %v2032
    %v2034 = vpop.f32.mrf.mxu0
    %v2035 = vadd.f32 0.0, %v2034
    %2036 = vmatprep.mubr.bf16.mxu0 0
    %2037 = vmatmul.mubr.bf16.gmra.mxu0 %v1898
    %v2038 = vpop.f32.mrf.mxu0
    %v2039 = vadd.f32 0.0, %v2038
    %v2040 = vpop.f32.mrf.mxu0
    %v2041 = vadd.f32 0.0, %v2040
    %v2042 = vpop.f32.mrf.mxu0
    %v2043 = vadd.f32 0.0, %v2042
    %v2044 = vpop.f32.mrf.mxu0
    %v2045 = vadd.f32 0.0, %v2044
    %2046 = vmatprep.mubr.bf16.mxu0 0
    %2047 = vmatmul.mubr.bf16.gmra.mxu0 %v1899
    %v2048 = vpop.f32.mrf.mxu0
    %v2049 = vadd.f32 0.0, %v2048
    %v2050 = vpop.f32.mrf.mxu0
    %v2051 = vadd.f32 0.0, %v2050
    %v2052 = vpop.f32.mrf.mxu0
    %v2053 = vadd.f32 0.0, %v2052
    %v2054 = vpop.f32.mrf.mxu0
    %v2055 = vadd.f32 0.0, %v2054
    %2056 = vmatprep.mubr.bf16.mxu0 0
    %2057 = vmatmul.mubr.bf16.gmra.mxu0 %v1900
    %v2058 = vpop.f32.mrf.mxu0
    %v2059 = vadd.f32 0.0, %v2058
    %v2060 = vpop.f32.mrf.mxu0
    %v2061 = vadd.f32 0.0, %v2060
    %v2062 = vpop.f32.mrf.mxu0
    %v2063 = vadd.f32 0.0, %v2062
    %v2064 = vpop.f32.mrf.mxu0
    %v2065 = vadd.f32 0.0, %v2064
    %2066 = vmatprep.mubr.bf16.mxu0 0
    %2067 = vmatmul.mubr.bf16.gmra.mxu0 %v1901
    %v2068 = vpop.f32.mrf.mxu0
    %v2069 = vadd.f32 0.0, %v2068
    %v2070 = vpop.f32.mrf.mxu0
    %v2071 = vadd.f32 0.0, %v2070
    %v2072 = vpop.f32.mrf.mxu0
    %v2073 = vadd.f32 0.0, %v2072
    %v2074 = vpop.f32.mrf.mxu0
    %v2075 = vadd.f32 0.0, %v2074
    %2076 = vdwg.mxu0
    %v2077 = vpack.c.bf16 %v2023, %v2019
    %v2078 = vpack.c.bf16 %v2025, %v2021
    %v2079 = vpack.c.bf16 %v2033, %v2029
    %v2080 = vpack.c.bf16 %v2035, %v2031
    %v2085 = vunpack.c.l.b16 %v2077
    %v2086 = vunpack.c.l.b16 %v2078
    %v2087 = vunpack.c.h.b16 %v2077
    %v2088 = vunpack.c.h.b16 %v2078
    %v2089 = vunpack.c.l.b16 %v2079
    %v2090 = vunpack.c.l.b16 %v2080
    %v2091 = vunpack.c.h.b16 %v2079
    %v2092 = vunpack.c.h.b16 %v2080
    %v2093 = vpack.c.b16 %v2086, %v2085
    %v2094 = vpack.c.b16 %v2088, %v2087
    %v2095 = vpack.c.b16 %v2090, %v2089
    %v2096 = vpack.c.b16 %v2092, %v2091
    %2101 = vst [vmem:[#allocation2] sm:$0xff] %v2093
    %2102 = vst [vmem:[#allocation2 + $0x8] sm:$0xff] %v2094
    %2103 = vst [vmem:[#allocation2 + $0x10] sm:$0xff] %v2095
    %2104 = vst [vmem:[#allocation2 + $0x18] sm:$0xff] %v2096
    %v2105 = vpack.c.bf16 %v2043, %v2039
    %v2106 = vpack.c.bf16 %v2045, %v2041
    %v2107 = vpack.c.bf16 %v2053, %v2049
    %v2108 = vpack.c.bf16 %v2055, %v2051
    %v2113 = vunpack.c.l.b16 %v2105
    %v2114 = vunpack.c.l.b16 %v2106
    %v2115 = vunpack.c.h.b16 %v2105
    %v2116 = vunpack.c.h.b16 %v2106
    %v2117 = vunpack.c.l.b16 %v2107
    %v2118 = vunpack.c.l.b16 %v2108
    %v2119 = vunpack.c.h.b16 %v2107
    %v2120 = vunpack.c.h.b16 %v2108
    %v2121 = vpack.c.b16 %v2114, %v2113
    %v2122 = vpack.c.b16 %v2116, %v2115
    %v2123 = vpack.c.b16 %v2118, %v2117
    %v2124 = vpack.c.b16 %v2120, %v2119
    %s2129 = scalar_lea.vmem [#allocation2], 32
    %2130 = vst [vmem:[%s2129] sm:$0xff] %v2121
    %2131 = vst [vmem:[%s2129 + $0x8] sm:$0xff] %v2122
    %2132 = vst [vmem:[%s2129 + $0x10] sm:$0xff] %v2123
    %2133 = vst [vmem:[%s2129 + $0x18] sm:$0xff] %v2124
    %v2134 = vpack.c.bf16 %v2063, %v2059
    %v2135 = vpack.c.bf16 %v2065, %v2061
    %v2136 = vpack.c.bf16 %v2073, %v2069
    %v2137 = vpack.c.bf16 %v2075, %v2071
    %v2142 = vunpack.c.l.b16 %v2134
    %v2143 = vunpack.c.l.b16 %v2135
    %v2144 = vunpack.c.h.b16 %v2134
    %v2145 = vunpack.c.h.b16 %v2135
    %v2146 = vunpack.c.l.b16 %v2136
    %v2147 = vunpack.c.l.b16 %v2137
    %v2148 = vunpack.c.h.b16 %v2136
    %v2149 = vunpack.c.h.b16 %v2137
    %v2150 = vpack.c.b16 %v2143, %v2142
    %v2151 = vpack.c.b16 %v2145, %v2144
    %v2152 = vpack.c.b16 %v2147, %v2146
    %v2153 = vpack.c.b16 %v2149, %v2148
    %s2158 = scalar_lea.vmem [#allocation2], 64
    %2159 = vst [vmem:[%s2158] sm:$0xff] %v2150
    %2160 = vst [vmem:[%s2158 + $0x8] sm:$0xff] %v2151
    %2161 = vst [vmem:[%s2158 + $0x10] sm:$0xff] %v2152
    %2162 = vst [vmem:[%s2158 + $0x18] sm:$0xff] %v2153
    // Predicated region
    $region14: #{tpu_custom_call.1} parent=1 // pred_check
      _
    $region15: #{tpu_custom_call.1} parent=1 // pred_check_branch
      %2164 = sbr.rel (0) target = $region17
    $region16: #{tpu_custom_call.1} parent=1 // pred_region
      %s2166 = ssub.s32 1536, 1536
      %2167 = vsyncadd [#allocation3], %s2166
      %s2168 = sshll.u32 [#allocation2], 4
      %s2169 = int_to_ptr.vmem [resolvable:$true] %s2168
      %2174 = dma.vmem_to_hbm [thread:$0]  %s2169, 1536, %s3, [#allocation3], 128, 128, 8
    $region17: #{tpu_custom_call.1} parent=1 // pred_fallthru
      _
    // Predicated region
    $region18: #{tpu_custom_call.1} parent=1 // pred_check
      _
    $region19: #{tpu_custom_call.1} parent=1 // pred_check_branch
      %2176 = sbr.rel (0) target = $region21
    $region20: #{tpu_custom_call.1} parent=1 // pred_region
      %2177 = dma.done [#allocation3], 1536
    $region21: #{tpu_custom_call.1} parent=1 // pred_fallthru
      _
    %2178 = vsyncpa [#allocation3], 1

</llo_original>
